<compile_context>
chip_gen: v7x
topology: tpu7x:2x2x1
jax: 0.10.0
libtpu: 0.0.40
codegen_flags: <defaults>
</compile_context>

<pallas_src>
import functools
import math

import jax
import jax.numpy as jnp
from jax import lax
from jax.experimental import pallas as pl
from jax.experimental.pallas import tpu as pltpu


# Small compatibility shim (reference API name, with a safe fallback).
_CompilerParams = getattr(pltpu, "CompilerParams", None) or getattr(pltpu, "TPUCompilerParams")


def _approx_recip(x):
    if hasattr(pl, "reciprocal"):
        return pl.reciprocal(x, approx=True)
    return 1.0 / x


def _layernorm(x, g, b, eps=1e-5):
    mu = jnp.mean(x, axis=-1, keepdims=True)
    var = jnp.mean(jnp.square(x - mu), axis=-1, keepdims=True)
    return (x - mu) * lax.rsqrt(var + eps) * g + b


# ----------------------------------------------------------------------------
# Fused kernel: one grid step == one full transformer layer (attn + FF blocks)
# ----------------------------------------------------------------------------
def _fused_transformer_kernel(
    x_ref,                                   # (R, D)  f32, R = B*N   (loaded once)
    a_g_ref, a_b_ref,                        # (1, 1, D) f32          attn LayerNorm
    qkv_w_ref,                               # (1, D, 3*inner) bf16   to_qkv (no bias)
    out_w_ref, out_b_ref,                    # (1, inner, D) bf16 / (1, 1, D) f32
    f_g_ref, f_b_ref,                        # (1, 1, D) f32          ff LayerNorm
    w1_ref, b1_ref,                          # (1, D, H) bf16 / (1, 1, H) f32
    w2_ref, b2_ref,                          # (1, H, D) bf16 / (1, 1, D) f32
    o_ref,                                   # (R, D) f32   resident activation carry
    head_acc,                                # VMEM (R, inner) f32 scratch
    *, batch, tokens, heads, dim_head, scale):
    layer = pl.program_id(0)

    @pl.when(layer == 0)
    def _():
        o_ref[...] = x_ref[...]              # seed the resident carry with the input

    x = o_ref[...]                           # (R, D) f32, stays in VMEM across layers
    inner = heads * dim_head

    # ---- PreNorm + multi-head attention + output projection + residual ----
    xn = _layernorm(x, a_g_ref[0], a_b_ref[0])
    qkv = jnp.dot(xn.astype(jnp.bfloat16), qkv_w_ref[0],
                  preferred_element_type=jnp.float32)       # (R, 3*inner) f32
    qkv = qkv.astype(jnp.bfloat16)                          # one full-slab cast

    for b in range(batch):                                  # static unroll (tiny B, heads)
        r0 = b * tokens
        for h in range(heads):
            c0 = h * dim_head
            q = qkv[r0:r0 + tokens, c0:c0 + dim_head]
            k = qkv[r0:r0 + tokens, inner + c0:inner + c0 + dim_head]
            v = qkv[r0:r0 + tokens, 2 * inner + c0:2 * inner + c0 + dim_head]

            # Contract the head dim directly -- no materialized k.T.
            s = lax.dot_general(q, k, (((1,), (1,)), ((), ())),
                                preferred_element_type=jnp.float32) * scale
            s = s - jnp.max(s, axis=-1, keepdims=True)
            p = jnp.exp(s)
            p = p * _approx_recip(jnp.sum(p, axis=-1, keepdims=True))

            head_acc[r0:r0 + tokens, c0:c0 + dim_head] = jnp.dot(
                p.astype(jnp.bfloat16), v, preferred_element_type=jnp.float32)

    y = jnp.dot(head_acc[...].astype(jnp.bfloat16), out_w_ref[0],
                preferred_element_type=jnp.float32) + out_b_ref[0]
    x = x + y                                               # fused residual add

    # ---- PreNorm + MLP (Linear -> GELU -> Linear) + residual ----
    xn = _layernorm(x, f_g_ref[0], f_b_ref[0])
    hdn = jnp.dot(xn.astype(jnp.bfloat16), w1_ref[0],
                  preferred_element_type=jnp.float32) + b1_ref[0]
    # TODO(synk): PyTorch nn.GELU defaults to the exact erf-based GELU; the tanh
    # approximation is used here (differences ~1e-3).
    hdn = jax.nn.gelu(hdn, approximate=True)
    y = jnp.dot(hdn.astype(jnp.bfloat16), w2_ref[0],
                preferred_element_type=jnp.float32) + b2_ref[0]
    o_ref[...] = x + y                                      # stays resident; HBM write at end


# ----------------------------------------------------------------------------
# Wrapper: single pallas_call over the depth axis, weights streamed per layer
# ----------------------------------------------------------------------------
_WEIGHT_NAMES = ("attn_ln_g", "attn_ln_b", "qkv_w", "out_w", "out_b",
                 "ff_ln_g", "ff_ln_b", "w1", "b1", "w2", "b2")


def transformer_forward(params, x, *, heads, dim_head):
    """x: (B, N, dim) tokens -> (B, N, dim)."""
    B, N, D = x.shape
    R = B * N
    inner = heads * dim_head
    depth = params["qkv_w"].shape[0]

    kernel = functools.partial(
        _fused_transformer_kernel, batch=B, tokens=N, heads=heads,
        dim_head=dim_head, scale=float(dim_head) ** -0.5)

    def resident(shape):
        return pl.BlockSpec(shape, lambda l, _n=len(shape): (0,) * _n)

    def per_layer(arr):
        nz = arr.ndim - 1
        return pl.BlockSpec((1,) + arr.shape[1:],
                            lambda l, _nz=nz: (l,) + (0,) * _nz)

    weights = [params[n] for n in _WEIGHT_NAMES]

    out = pl.pallas_call(
        kernel,
        grid=(depth,),
        in_specs=[resident((R, D))] + [per_layer(w) for w in weights],
        out_specs=resident((R, D)),
        out_shape=jax.ShapeDtypeStruct((R, D), jnp.float32),
        scratch_shapes=[pltpu.VMEM((R, inner), jnp.float32)],
        compiler_params=_CompilerParams(
            dimension_semantics=("arbitrary",),           # layers are sequential
            vmem_limit_bytes=48 * 1024 * 1024,
        ),
    )(x.reshape(R, D), *weights)
    return out.reshape(B, N, D)


# ----------------------------------------------------------------------------
# Parameter init (xavier-normal weights, zero biases, LN weight=1 / bias=0),
# stacked along a leading depth axis so they stream through the grid.
# ----------------------------------------------------------------------------
def init_params(key, cfg):
    dim = cfg["dim"]
    depth = cfg["depth"]
    heads = cfg["heads"]
    dim_head = cfg["dim_head"]
    hidden = cfg["mlp_dim"]
    inner = heads * dim_head

    keys = iter(jax.random.split(key, 4 * depth + 4))

    def xavier(shape):
        fan_in, fan_out = shape
        std = math.sqrt(2.0 / (fan_in + fan_out))
        return std * jax.random.normal(next(keys), shape, dtype=jnp.float32)

    def stacked(shape):
        return jnp.stack([xavier(shape) for _ in range(depth)], axis=0)

    return {
        "attn_ln_g": jnp.ones((depth, 1, dim), jnp.float32),
        "attn_ln_b": jnp.zeros((depth, 1, dim), jnp.float32),
        # to_qkv: Linear(dim, 3*inner, bias=False)  (bf16 operands for the MXU)
        "qkv_w": stacked((dim, 3 * inner)).astype(jnp.bfloat16),
        # to_out: Linear(inner, dim) (+ Dropout(0) = identity)
        "out_w": stacked((inner, dim)).astype(jnp.bfloat16),
        "out_b": jnp.zeros((depth, 1, dim), jnp.float32),
        "ff_ln_g": jnp.ones((depth, 1, dim), jnp.float32),
        "ff_ln_b": jnp.zeros((depth, 1, dim), jnp.float32),
        "w1": stacked((dim, hidden)).astype(jnp.bfloat16),
        "b1": jnp.zeros((depth, 1, hidden), jnp.float32),
        "w2": stacked((hidden, dim)).astype(jnp.bfloat16),
        "b2": jnp.zeros((depth, 1, dim), jnp.float32),
    }


# ----------------------------------------------------------------------------
if __name__ == "__main__":
    key = jax.random.PRNGKey(0)
    pkey, xkey = jax.random.split(key)

    # Small shapes consistent with the module: Transformer(dim, num_patches, depth,
    # heads, dim_head, mlp_dim) operating on (B, num_patches**2 + 1, dim) tokens.
    cfg = dict(dim=32, num_patches=4, depth=2, heads=2, dim_head=16, mlp_dim=64)
    params = init_params(pkey, cfg)

    B = 2
    N = cfg["num_patches"] ** 2 + 1          # patch tokens + cls token = 17
    x = jax.random.normal(xkey, (B, N, cfg["dim"]), dtype=jnp.float32)

    fwd = jax.jit(functools.partial(transformer_forward,
                                    heads=cfg["heads"], dim_head=cfg["dim_head"]))
    out = fwd(params, x)
    jax.block_until_ready(out)

    assert out.shape == (B, N, cfg["dim"]), out.shape
    assert bool(jnp.all(jnp.isfinite(out)))
    print("KERNEL_OK")
</pallas_src>

<mosaic_0001>
module attributes {stable_mosaic.version = 11 : i64} {
  func.func @_fused_transformer_kernel(%arg0: i32, %arg1: memref<34x32xf32, #tpu.memory_space<vmem>>, %arg2: memref<1x1x32xf32, #tpu.memory_space<vmem>>, %arg3: memref<1x1x32xf32, #tpu.memory_space<vmem>>, %arg4: memref<1x32x96xbf16, #tpu.memory_space<vmem>>, %arg5: memref<1x32x32xbf16, #tpu.memory_space<vmem>>, %arg6: memref<1x1x32xf32, #tpu.memory_space<vmem>>, %arg7: memref<1x1x32xf32, #tpu.memory_space<vmem>>, %arg8: memref<1x1x32xf32, #tpu.memory_space<vmem>>, %arg9: memref<1x32x64xbf16, #tpu.memory_space<vmem>>, %arg10: memref<1x1x64xf32, #tpu.memory_space<vmem>>, %arg11: memref<1x64x32xbf16, #tpu.memory_space<vmem>>, %arg12: memref<1x1x32xf32, #tpu.memory_space<vmem>>, %arg13: memref<34x32xf32, #tpu.memory_space<vmem>>, %arg14: memref<34x32xf32, #tpu.memory_space<vmem>>) attributes {dimension_semantics = [#tpu.dimension_semantics<arbitrary>], iteration_bounds = array<i64: 2>, scalar_prefetch = 0 : i64, scratch_operands = 1 : i64, tpu.core_type = #tpu.core_type<tc>, window_params = [{pipeline_mode = #tpu.pipeline_mode<synchronous>, transform_indices = @transform_0, window_bounds = array<i64: 34, 32>}, {transform_indices = @transform_1, window_bounds = array<i64: 1, 1, 32>}, {transform_indices = @transform_2, window_bounds = array<i64: 1, 1, 32>}, {transform_indices = @transform_3, window_bounds = array<i64: 1, 32, 96>}, {transform_indices = @transform_4, window_bounds = array<i64: 1, 32, 32>}, {transform_indices = @transform_5, window_bounds = array<i64: 1, 1, 32>}, {transform_indices = @transform_6, window_bounds = array<i64: 1, 1, 32>}, {transform_indices = @transform_7, window_bounds = array<i64: 1, 1, 32>}, {transform_indices = @transform_8, window_bounds = array<i64: 1, 32, 64>}, {transform_indices = @transform_9, window_bounds = array<i64: 1, 1, 64>}, {transform_indices = @transform_10, window_bounds = array<i64: 1, 64, 32>}, {transform_indices = @transform_11, window_bounds = array<i64: 1, 1, 32>}, {pipeline_mode = #tpu.pipeline_mode<synchronous>, transform_indices = @transform_12, window_bounds = array<i64: 34, 32>}]} {
    %c0_i32 = arith.constant 0 : i32
    %0 = arith.cmpi eq, %arg0, %c0_i32 : i32
    %1 = arith.extui %0 : i1 to i32
    %c0_i32_0 = arith.constant 0 : i32
    %2 = arith.cmpi ne, %1, %c0_i32_0 : i32
    scf.if %2 {
      %c0_82 = arith.constant 0 : index
      %c0_83 = arith.constant 0 : index
      %178 = vector.load %arg1[%c0_82, %c0_83] : memref<34x32xf32, #tpu.memory_space<vmem>>, vector<34x32xf32>
      %c0_84 = arith.constant 0 : index
      %c0_85 = arith.constant 0 : index
      %179 = vector.load %arg13[%c0_84, %c0_85] : memref<34x32xf32, #tpu.memory_space<vmem>>, vector<34x32xf32>
      tpu.vector_store %arg13[%c0_84, %c0_85], %178 {strides = array<i32>} : memref<34x32xf32, #tpu.memory_space<vmem>>, vector<34x32xf32>,
    } else {
    }
    %c0 = arith.constant 0 : index
    %c0_1 = arith.constant 0 : index
    %3 = vector.load %arg13[%c0, %c0_1] : memref<34x32xf32, #tpu.memory_space<vmem>>, vector<34x32xf32>
    %c0_2 = arith.constant 0 : index
    %c0_3 = arith.constant 0 : index
    %c0_4 = arith.constant 0 : index
    %4 = vector.load %arg2[%c0_2, %c0_3, %c0_4] : memref<1x1x32xf32, #tpu.memory_space<vmem>>, vector<1x1x32xf32>
    %5 = vector.shape_cast %4 : vector<1x1x32xf32> to vector<1x32xf32>
    %c0_5 = arith.constant 0 : index
    %c0_6 = arith.constant 0 : index
    %c0_7 = arith.constant 0 : index
    %6 = vector.load %arg3[%c0_5, %c0_6, %c0_7] : memref<1x1x32xf32, #tpu.memory_space<vmem>>, vector<1x1x32xf32>
    %7 = vector.shape_cast %6 : vector<1x1x32xf32> to vector<1x32xf32>
    %cst = arith.constant dense<0.000000e+00> : vector<34xf32>
    %8 = vector.multi_reduction <add>, %3, %cst [1] : vector<34x32xf32> to vector<34xf32>
    %9 = vector.shape_cast %8 : vector<34xf32> to vector<34x1xf32>
    %cst_8 = arith.constant 3.200000e+01 : f32
    %10 = vector.broadcast %cst_8 : f32 to vector<34x1xf32>
    %11 = arith.divf %9, %10 : vector<34x1xf32>
    %12 = vector.broadcast %11 : vector<34x1xf32> to vector<34x32xf32>
    %13 = arith.subf %3, %12 : vector<34x32xf32>
    %14 = arith.mulf %13, %13 : vector<34x32xf32>
    %cst_9 = arith.constant dense<0.000000e+00> : vector<34xf32>
    %15 = vector.multi_reduction <add>, %14, %cst_9 [1] : vector<34x32xf32> to vector<34xf32>
    %16 = vector.shape_cast %15 : vector<34xf32> to vector<34x1xf32>
    %cst_10 = arith.constant 3.200000e+01 : f32
    %17 = vector.broadcast %cst_10 : f32 to vector<34x1xf32>
    %18 = arith.divf %16, %17 : vector<34x1xf32>
    %19 = vector.broadcast %11 : vector<34x1xf32> to vector<34x32xf32>
    %20 = arith.subf %3, %19 : vector<34x32xf32>
    %cst_11 = arith.constant 9.99999974E-6 : f32
    %21 = vector.broadcast %cst_11 : f32 to vector<34x1xf32>
    %22 = arith.addf %18, %21 : vector<34x1xf32>
    %23 = math.rsqrt %22 : vector<34x1xf32>
    %24 = vector.broadcast %23 : vector<34x1xf32> to vector<34x32xf32>
    %25 = arith.mulf %20, %24 : vector<34x32xf32>
    %26 = vector.broadcast %5 : vector<1x32xf32> to vector<34x32xf32>
    %27 = arith.mulf %25, %26 : vector<34x32xf32>
    %28 = vector.broadcast %7 : vector<1x32xf32> to vector<34x32xf32>
    %29 = arith.addf %27, %28 : vector<34x32xf32>
    %30 = arith.truncf %29 : vector<34x32xf32> to vector<34x32xbf16>
    %c0_12 = arith.constant 0 : index
    %c0_13 = arith.constant 0 : index
    %c0_14 = arith.constant 0 : index
    %31 = vector.load %arg4[%c0_12, %c0_13, %c0_14] : memref<1x32x96xbf16, #tpu.memory_space<vmem>>, vector<1x32x96xbf16>
    %32 = vector.shape_cast %31 : vector<1x32x96xbf16> to vector<32x96xbf16>
    %cst_15 = arith.constant dense<0.000000e+00> : vector<34x96xf32>
    %33 = tpu.matmul %30, %32, %cst_15 {dimension_numbers = #tpu.dot_dimension_numbers<[1], [0], [0], [1], [0, 0, 1, 1], [], []>} : vector<34x32xbf16>, vector<32x96xbf16>, vector<34x96xf32> -> vector<34x96xf32>
    %34 = arith.truncf %33 : vector<34x96xf32> to vector<34x96xbf16>
    %35 = vector.extract_strided_slice %34 {offsets = [0, 0], sizes = [17, 16], strides = [1, 1]} : vector<34x96xbf16> to vector<17x16xbf16>
    %36 = vector.extract_strided_slice %34 {offsets = [0, 32], sizes = [17, 16], strides = [1, 1]} : vector<34x96xbf16> to vector<17x16xbf16>
    %37 = vector.extract_strided_slice %34 {offsets = [0, 64], sizes = [17, 16], strides = [1, 1]} : vector<34x96xbf16> to vector<17x16xbf16>
    %cst_16 = arith.constant dense<0.000000e+00> : vector<17x17xf32>
    %38 = tpu.matmul %35, %36, %cst_16 {dimension_numbers = #tpu.dot_dimension_numbers<[1], [1], [0], [0], [0, 0, 1, 0], [], []>} : vector<17x16xbf16>, vector<17x16xbf16>, vector<17x17xf32> -> vector<17x17xf32>
    %cst_17 = arith.constant 2.500000e-01 : f32
    %39 = vector.broadcast %cst_17 : f32 to vector<17x17xf32>
    %40 = arith.mulf %38, %39 : vector<17x17xf32>
    %cst_18 = arith.constant dense<0xFF800000> : vector<17xf32>
    %41 = vector.multi_reduction <maximumf>, %40, %cst_18 [1] : vector<17x17xf32> to vector<17xf32>
    %42 = vector.shape_cast %41 : vector<17xf32> to vector<17x1xf32>
    %43 = vector.broadcast %42 : vector<17x1xf32> to vector<17x17xf32>
    %44 = arith.subf %40, %43 : vector<17x17xf32>
    %45 = math.exp %44 : vector<17x17xf32>
    %cst_19 = arith.constant dense<0.000000e+00> : vector<17xf32>
    %46 = vector.multi_reduction <add>, %45, %cst_19 [1] : vector<17x17xf32> to vector<17xf32>
    %47 = vector.shape_cast %46 : vector<17xf32> to vector<17x1xf32>
    %48 = tpu.reciprocal %47 {approx = true} : vector<17x1xf32> -> vector<17x1xf32>
    %49 = vector.broadcast %48 : vector<17x1xf32> to vector<17x17xf32>
    %50 = arith.mulf %45, %49 : vector<17x17xf32>
    %51 = arith.truncf %50 : vector<17x17xf32> to vector<17x17xbf16>
    %cst_20 = arith.constant dense<0.000000e+00> : vector<17x16xf32>
    %52 = tpu.matmul %51, %37, %cst_20 {dimension_numbers = #tpu.dot_dimension_numbers<[1], [0], [0], [1], [0, 0, 1, 1], [], []>} : vector<17x17xbf16>, vector<17x16xbf16>, vector<17x16xf32> -> vector<17x16xf32>
    %c0_21 = arith.constant 0 : index
    %c0_22 = arith.constant 0 : index
    %53 = vector.load %arg14[%c0_21, %c0_22] : memref<34x32xf32, #tpu.memory_space<vmem>>, vector<17x16xf32>
    tpu.vector_store %arg14[%c0_21, %c0_22], %52 {strides = array<i32>} : memref<34x32xf32, #tpu.memory_space<vmem>>, vector<17x16xf32>,
    %54 = vector.extract_strided_slice %34 {offsets = [0, 16], sizes = [17, 16], strides = [1, 1]} : vector<34x96xbf16> to vector<17x16xbf16>
    %55 = vector.extract_strided_slice %34 {offsets = [0, 48], sizes = [17, 16], strides = [1, 1]} : vector<34x96xbf16> to vector<17x16xbf16>
    %56 = vector.extract_strided_slice %34 {offsets = [0, 80], sizes = [17, 16], strides = [1, 1]} : vector<34x96xbf16> to vector<17x16xbf16>
    %cst_23 = arith.constant dense<0.000000e+00> : vector<17x17xf32>
    %57 = tpu.matmul %54, %55, %cst_23 {dimension_numbers = #tpu.dot_dimension_numbers<[1], [1], [0], [0], [0, 0, 1, 0], [], []>} : vector<17x16xbf16>, vector<17x16xbf16>, vector<17x17xf32> -> vector<17x17xf32>
    %cst_24 = arith.constant 2.500000e-01 : f32
    %58 = vector.broadcast %cst_24 : f32 to vector<17x17xf32>
    %59 = arith.mulf %57, %58 : vector<17x17xf32>
    %cst_25 = arith.constant dense<0xFF800000> : vector<17xf32>
    %60 = vector.multi_reduction <maximumf>, %59, %cst_25 [1] : vector<17x17xf32> to vector<17xf32>
    %61 = vector.shape_cast %60 : vector<17xf32> to vector<17x1xf32>
    %62 = vector.broadcast %61 : vector<17x1xf32> to vector<17x17xf32>
    %63 = arith.subf %59, %62 : vector<17x17xf32>
    %64 = math.exp %63 : vector<17x17xf32>
    %cst_26 = arith.constant dense<0.000000e+00> : vector<17xf32>
    %65 = vector.multi_reduction <add>, %64, %cst_26 [1] : vector<17x17xf32> to vector<17xf32>
    %66 = vector.shape_cast %65 : vector<17xf32> to vector<17x1xf32>
    %67 = tpu.reciprocal %66 {approx = true} : vector<17x1xf32> -> vector<17x1xf32>
    %68 = vector.broadcast %67 : vector<17x1xf32> to vector<17x17xf32>
    %69 = arith.mulf %64, %68 : vector<17x17xf32>
    %70 = arith.truncf %69 : vector<17x17xf32> to vector<17x17xbf16>
    %cst_27 = arith.constant dense<0.000000e+00> : vector<17x16xf32>
    %71 = tpu.matmul %70, %56, %cst_27 {dimension_numbers = #tpu.dot_dimension_numbers<[1], [0], [0], [1], [0, 0, 1, 1], [], []>} : vector<17x17xbf16>, vector<17x16xbf16>, vector<17x16xf32> -> vector<17x16xf32>
    %c0_28 = arith.constant 0 : index
    %c16 = arith.constant 16 : index
    %72 = vector.load %arg14[%c0_28, %c16] : memref<34x32xf32, #tpu.memory_space<vmem>>, vector<17x16xf32>
    tpu.vector_store %arg14[%c0_28, %c16], %71 {strides = array<i32>} : memref<34x32xf32, #tpu.memory_space<vmem>>, vector<17x16xf32>,
    %73 = vector.extract_strided_slice %34 {offsets = [17, 0], sizes = [17, 16], strides = [1, 1]} : vector<34x96xbf16> to vector<17x16xbf16>
    %74 = vector.extract_strided_slice %34 {offsets = [17, 32], sizes = [17, 16], strides = [1, 1]} : vector<34x96xbf16> to vector<17x16xbf16>
    %75 = vector.extract_strided_slice %34 {offsets = [17, 64], sizes = [17, 16], strides = [1, 1]} : vector<34x96xbf16> to vector<17x16xbf16>
    %cst_29 = arith.constant dense<0.000000e+00> : vector<17x17xf32>
    %76 = tpu.matmul %73, %74, %cst_29 {dimension_numbers = #tpu.dot_dimension_numbers<[1], [1], [0], [0], [0, 0, 1, 0], [], []>} : vector<17x16xbf16>, vector<17x16xbf16>, vector<17x17xf32> -> vector<17x17xf32>
    %cst_30 = arith.constant 2.500000e-01 : f32
    %77 = vector.broadcast %cst_30 : f32 to vector<17x17xf32>
    %78 = arith.mulf %76, %77 : vector<17x17xf32>
    %cst_31 = arith.constant dense<0xFF800000> : vector<17xf32>
    %79 = vector.multi_reduction <maximumf>, %78, %cst_31 [1] : vector<17x17xf32> to vector<17xf32>
    %80 = vector.shape_cast %79 : vector<17xf32> to vector<17x1xf32>
    %81 = vector.broadcast %80 : vector<17x1xf32> to vector<17x17xf32>
    %82 = arith.subf %78, %81 : vector<17x17xf32>
    %83 = math.exp %82 : vector<17x17xf32>
    %cst_32 = arith.constant dense<0.000000e+00> : vector<17xf32>
    %84 = vector.multi_reduction <add>, %83, %cst_32 [1] : vector<17x17xf32> to vector<17xf32>
    %85 = vector.shape_cast %84 : vector<17xf32> to vector<17x1xf32>
    %86 = tpu.reciprocal %85 {approx = true} : vector<17x1xf32> -> vector<17x1xf32>
    %87 = vector.broadcast %86 : vector<17x1xf32> to vector<17x17xf32>
    %88 = arith.mulf %83, %87 : vector<17x17xf32>
    %89 = arith.truncf %88 : vector<17x17xf32> to vector<17x17xbf16>
    %cst_33 = arith.constant dense<0.000000e+00> : vector<17x16xf32>
    %90 = tpu.matmul %89, %75, %cst_33 {dimension_numbers = #tpu.dot_dimension_numbers<[1], [0], [0], [1], [0, 0, 1, 1], [], []>} : vector<17x17xbf16>, vector<17x16xbf16>, vector<17x16xf32> -> vector<17x16xf32>
    %c17 = arith.constant 17 : index
    %c0_34 = arith.constant 0 : index
    %91 = vector.load %arg14[%c17, %c0_34] : memref<34x32xf32, #tpu.memory_space<vmem>>, vector<17x16xf32>
    tpu.vector_store %arg14[%c17, %c0_34], %90 {strides = array<i32>} : memref<34x32xf32, #tpu.memory_space<vmem>>, vector<17x16xf32>,
    %92 = vector.extract_strided_slice %34 {offsets = [17, 16], sizes = [17, 16], strides = [1, 1]} : vector<34x96xbf16> to vector<17x16xbf16>
    %93 = vector.extract_strided_slice %34 {offsets = [17, 48], sizes = [17, 16], strides = [1, 1]} : vector<34x96xbf16> to vector<17x16xbf16>
    %94 = vector.extract_strided_slice %34 {offsets = [17, 80], sizes = [17, 16], strides = [1, 1]} : vector<34x96xbf16> to vector<17x16xbf16>
    %cst_35 = arith.constant dense<0.000000e+00> : vector<17x17xf32>
    %95 = tpu.matmul %92, %93, %cst_35 {dimension_numbers = #tpu.dot_dimension_numbers<[1], [1], [0], [0], [0, 0, 1, 0], [], []>} : vector<17x16xbf16>, vector<17x16xbf16>, vector<17x17xf32> -> vector<17x17xf32>
    %cst_36 = arith.constant 2.500000e-01 : f32
    %96 = vector.broadcast %cst_36 : f32 to vector<17x17xf32>
    %97 = arith.mulf %95, %96 : vector<17x17xf32>
    %cst_37 = arith.constant dense<0xFF800000> : vector<17xf32>
    %98 = vector.multi_reduction <maximumf>, %97, %cst_37 [1] : vector<17x17xf32> to vector<17xf32>
    %99 = vector.shape_cast %98 : vector<17xf32> to vector<17x1xf32>
    %100 = vector.broadcast %99 : vector<17x1xf32> to vector<17x17xf32>
    %101 = arith.subf %97, %100 : vector<17x17xf32>
    %102 = math.exp %101 : vector<17x17xf32>
    %cst_38 = arith.constant dense<0.000000e+00> : vector<17xf32>
    %103 = vector.multi_reduction <add>, %102, %cst_38 [1] : vector<17x17xf32> to vector<17xf32>
    %104 = vector.shape_cast %103 : vector<17xf32> to vector<17x1xf32>
    %105 = tpu.reciprocal %104 {approx = true} : vector<17x1xf32> -> vector<17x1xf32>
    %106 = vector.broadcast %105 : vector<17x1xf32> to vector<17x17xf32>
    %107 = arith.mulf %102, %106 : vector<17x17xf32>
    %108 = arith.truncf %107 : vector<17x17xf32> to vector<17x17xbf16>
    %cst_39 = arith.constant dense<0.000000e+00> : vector<17x16xf32>
    %109 = tpu.matmul %108, %94, %cst_39 {dimension_numbers = #tpu.dot_dimension_numbers<[1], [0], [0], [1], [0, 0, 1, 1], [], []>} : vector<17x17xbf16>, vector<17x16xbf16>, vector<17x16xf32> -> vector<17x16xf32>
    %c17_40 = arith.constant 17 : index
    %c16_41 = arith.constant 16 : index
    %110 = vector.load %arg14[%c17_40, %c16_41] : memref<34x32xf32, #tpu.memory_space<vmem>>, vector<17x16xf32>
    tpu.vector_store %arg14[%c17_40, %c16_41], %109 {strides = array<i32>} : memref<34x32xf32, #tpu.memory_space<vmem>>, vector<17x16xf32>,
    %c0_42 = arith.constant 0 : index
    %c0_43 = arith.constant 0 : index
    %111 = vector.load %arg14[%c0_42, %c0_43] : memref<34x32xf32, #tpu.memory_space<vmem>>, vector<34x32xf32>
    %112 = arith.truncf %111 : vector<34x32xf32> to vector<34x32xbf16>
    %c0_44 = arith.constant 0 : index
    %c0_45 = arith.constant 0 : index
    %c0_46 = arith.constant 0 : index
    %113 = vector.load %arg5[%c0_44, %c0_45, %c0_46] : memref<1x32x32xbf16, #tpu.memory_space<vmem>>, vector<1x32x32xbf16>
    %114 = vector.shape_cast %113 : vector<1x32x32xbf16> to vector<32x32xbf16>
    %cst_47 = arith.constant dense<0.000000e+00> : vector<34x32xf32>
    %115 = tpu.matmul %112, %114, %cst_47 {dimension_numbers = #tpu.dot_dimension_numbers<[1], [0], [0], [1], [0, 0, 1, 1], [], []>} : vector<34x32xbf16>, vector<32x32xbf16>, vector<34x32xf32> -> vector<34x32xf32>
    %c0_48 = arith.constant 0 : index
    %c0_49 = arith.constant 0 : index
    %c0_50 = arith.constant 0 : index
    %116 = vector.load %arg6[%c0_48, %c0_49, %c0_50] : memref<1x1x32xf32, #tpu.memory_space<vmem>>, vector<1x1x32xf32>
    %117 = vector.shape_cast %116 : vector<1x1x32xf32> to vector<1x32xf32>
    %118 = vector.broadcast %117 : vector<1x32xf32> to vector<34x32xf32>
    %119 = arith.addf %115, %118 : vector<34x32xf32>
    %120 = arith.addf %3, %119 : vector<34x32xf32>
    %c0_51 = arith.constant 0 : index
    %c0_52 = arith.constant 0 : index
    %c0_53 = arith.constant 0 : index
    %121 = vector.load %arg7[%c0_51, %c0_52, %c0_53] : memref<1x1x32xf32, #tpu.memory_space<vmem>>, vector<1x1x32xf32>
    %122 = vector.shape_cast %121 : vector<1x1x32xf32> to vector<1x32xf32>
    %c0_54 = arith.constant 0 : index
    %c0_55 = arith.constant 0 : index
    %c0_56 = arith.constant 0 : index
    %123 = vector.load %arg8[%c0_54, %c0_55, %c0_56] : memref<1x1x32xf32, #tpu.memory_space<vmem>>, vector<1x1x32xf32>
    %124 = vector.shape_cast %123 : vector<1x1x32xf32> to vector<1x32xf32>
    %cst_57 = arith.constant dense<0.000000e+00> : vector<34xf32>
    %125 = vector.multi_reduction <add>, %120, %cst_57 [1] : vector<34x32xf32> to vector<34xf32>
    %126 = vector.shape_cast %125 : vector<34xf32> to vector<34x1xf32>
    %cst_58 = arith.constant 3.200000e+01 : f32
    %127 = vector.broadcast %cst_58 : f32 to vector<34x1xf32>
    %128 = arith.divf %126, %127 : vector<34x1xf32>
    %129 = vector.broadcast %128 : vector<34x1xf32> to vector<34x32xf32>
    %130 = arith.subf %120, %129 : vector<34x32xf32>
    %131 = arith.mulf %130, %130 : vector<34x32xf32>
    %cst_59 = arith.constant dense<0.000000e+00> : vector<34xf32>
    %132 = vector.multi_reduction <add>, %131, %cst_59 [1] : vector<34x32xf32> to vector<34xf32>
    %133 = vector.shape_cast %132 : vector<34xf32> to vector<34x1xf32>
    %cst_60 = arith.constant 3.200000e+01 : f32
    %134 = vector.broadcast %cst_60 : f32 to vector<34x1xf32>
    %135 = arith.divf %133, %134 : vector<34x1xf32>
    %136 = vector.broadcast %128 : vector<34x1xf32> to vector<34x32xf32>
    %137 = arith.subf %120, %136 : vector<34x32xf32>
    %cst_61 = arith.constant 9.99999974E-6 : f32
    %138 = vector.broadcast %cst_61 : f32 to vector<34x1xf32>
    %139 = arith.addf %135, %138 : vector<34x1xf32>
    %140 = math.rsqrt %139 : vector<34x1xf32>
    %141 = vector.broadcast %140 : vector<34x1xf32> to vector<34x32xf32>
    %142 = arith.mulf %137, %141 : vector<34x32xf32>
    %143 = vector.broadcast %122 : vector<1x32xf32> to vector<34x32xf32>
    %144 = arith.mulf %142, %143 : vector<34x32xf32>
    %145 = vector.broadcast %124 : vector<1x32xf32> to vector<34x32xf32>
    %146 = arith.addf %144, %145 : vector<34x32xf32>
    %147 = arith.truncf %146 : vector<34x32xf32> to vector<34x32xbf16>
    %c0_62 = arith.constant 0 : index
    %c0_63 = arith.constant 0 : index
    %c0_64 = arith.constant 0 : index
    %148 = vector.load %arg9[%c0_62, %c0_63, %c0_64] : memref<1x32x64xbf16, #tpu.memory_space<vmem>>, vector<1x32x64xbf16>
    %149 = vector.shape_cast %148 : vector<1x32x64xbf16> to vector<32x64xbf16>
    %cst_65 = arith.constant dense<0.000000e+00> : vector<34x64xf32>
    %150 = tpu.matmul %147, %149, %cst_65 {dimension_numbers = #tpu.dot_dimension_numbers<[1], [0], [0], [1], [0, 0, 1, 1], [], []>} : vector<34x32xbf16>, vector<32x64xbf16>, vector<34x64xf32> -> vector<34x64xf32>
    %c0_66 = arith.constant 0 : index
    %c0_67 = arith.constant 0 : index
    %c0_68 = arith.constant 0 : index
    %151 = vector.load %arg10[%c0_66, %c0_67, %c0_68] : memref<1x1x64xf32, #tpu.memory_space<vmem>>, vector<1x1x64xf32>
    %152 = vector.shape_cast %151 : vector<1x1x64xf32> to vector<1x64xf32>
    %153 = vector.broadcast %152 : vector<1x64xf32> to vector<34x64xf32>
    %154 = arith.addf %150, %153 : vector<34x64xf32>
    %155 = arith.mulf %154, %154 : vector<34x64xf32>
    %156 = arith.mulf %154, %155 : vector<34x64xf32>
    %cst_69 = arith.constant 4.471500e-02 : f32
    %157 = vector.broadcast %cst_69 : f32 to vector<34x64xf32>
    %158 = arith.mulf %157, %156 : vector<34x64xf32>
    %159 = arith.addf %154, %158 : vector<34x64xf32>
    %cst_70 = arith.constant 0.797884583 : f32
    %160 = vector.broadcast %cst_70 : f32 to vector<34x64xf32>
    %161 = arith.mulf %160, %159 : vector<34x64xf32>
    %162 = math.tanh %161 : vector<34x64xf32>
    %cst_71 = arith.constant 1.000000e+00 : f32
    %163 = vector.broadcast %cst_71 : f32 to vector<34x64xf32>
    %164 = arith.addf %163, %162 : vector<34x64xf32>
    %cst_72 = arith.constant 5.000000e-01 : f32
    %165 = vector.broadcast %cst_72 : f32 to vector<34x64xf32>
    %166 = arith.mulf %165, %164 : vector<34x64xf32>
    %167 = arith.mulf %154, %166 : vector<34x64xf32>
    %168 = arith.truncf %167 : vector<34x64xf32> to vector<34x64xbf16>
    %c0_73 = arith.constant 0 : index
    %c0_74 = arith.constant 0 : index
    %c0_75 = arith.constant 0 : index
    %169 = vector.load %arg11[%c0_73, %c0_74, %c0_75] : memref<1x64x32xbf16, #tpu.memory_space<vmem>>, vector<1x64x32xbf16>
    %170 = vector.shape_cast %169 : vector<1x64x32xbf16> to vector<64x32xbf16>
    %cst_76 = arith.constant dense<0.000000e+00> : vector<34x32xf32>
    %171 = tpu.matmul %168, %170, %cst_76 {dimension_numbers = #tpu.dot_dimension_numbers<[1], [0], [0], [1], [0, 0, 1, 1], [], []>} : vector<34x64xbf16>, vector<64x32xbf16>, vector<34x32xf32> -> vector<34x32xf32>
    %c0_77 = arith.constant 0 : index
    %c0_78 = arith.constant 0 : index
    %c0_79 = arith.constant 0 : index
    %172 = vector.load %arg12[%c0_77, %c0_78, %c0_79] : memref<1x1x32xf32, #tpu.memory_space<vmem>>, vector<1x1x32xf32>
    %173 = vector.shape_cast %172 : vector<1x1x32xf32> to vector<1x32xf32>
    %174 = vector.broadcast %173 : vector<1x32xf32> to vector<34x32xf32>
    %175 = arith.addf %171, %174 : vector<34x32xf32>
    %176 = arith.addf %120, %175 : vector<34x32xf32>
    %c0_80 = arith.constant 0 : index
    %c0_81 = arith.constant 0 : index
    %177 = vector.load %arg13[%c0_80, %c0_81] : memref<34x32xf32, #tpu.memory_space<vmem>>, vector<34x32xf32>
    tpu.vector_store %arg13[%c0_80, %c0_81], %176 {strides = array<i32>} : memref<34x32xf32, #tpu.memory_space<vmem>>, vector<34x32xf32>,
    return
  }
  func.func @transform_0(%arg0: i32) -> (i32, i32) {
    %c0_i32 = arith.constant 0 : i32
    %c0_i32_0 = arith.constant 0 : i32
    %c0_i32_1 = arith.constant 0 : i32
    return %c0_i32, %c0_i32_0 : i32, i32
  }
  func.func @transform_1(%arg0: i32) -> (i32, i32, i32) {
    %c0_i32 = arith.constant 0 : i32
    %c0_i32_0 = arith.constant 0 : i32
    %c0_i32_1 = arith.constant 0 : i32
    return %arg0, %c0_i32, %c0_i32_0 : i32, i32, i32
  }
  func.func @transform_2(%arg0: i32) -> (i32, i32, i32) {
    %c0_i32 = arith.constant 0 : i32
    %c0_i32_0 = arith.constant 0 : i32
    %c0_i32_1 = arith.constant 0 : i32
    return %arg0, %c0_i32, %c0_i32_0 : i32, i32, i32
  }
  func.func @transform_3(%arg0: i32) -> (i32, i32, i32) {
    %c0_i32 = arith.constant 0 : i32
    %c0_i32_0 = arith.constant 0 : i32
    %c0_i32_1 = arith.constant 0 : i32
    return %arg0, %c0_i32, %c0_i32_0 : i32, i32, i32
  }
  func.func @transform_4(%arg0: i32) -> (i32, i32, i32) {
    %c0_i32 = arith.constant 0 : i32
    %c0_i32_0 = arith.constant 0 : i32
    %c0_i32_1 = arith.constant 0 : i32
    return %arg0, %c0_i32, %c0_i32_0 : i32, i32, i32
  }
  func.func @transform_5(%arg0: i32) -> (i32, i32, i32) {
    %c0_i32 = arith.constant 0 : i32
    %c0_i32_0 = arith.constant 0 : i32
    %c0_i32_1 = arith.constant 0 : i32
    return %arg0, %c0_i32, %c0_i32_0 : i32, i32, i32
  }
  func.func @transform_6(%arg0: i32) -> (i32, i32, i32) {
    %c0_i32 = arith.constant 0 : i32
    %c0_i32_0 = arith.constant 0 : i32
    %c0_i32_1 = arith.constant 0 : i32
    return %arg0, %c0_i32, %c0_i32_0 : i32, i32, i32
  }
  func.func @transform_7(%arg0: i32) -> (i32, i32, i32) {
    %c0_i32 = arith.constant 0 : i32
    %c0_i32_0 = arith.constant 0 : i32
    %c0_i32_1 = arith.constant 0 : i32
    return %arg0, %c0_i32, %c0_i32_0 : i32, i32, i32
  }
  func.func @transform_8(%arg0: i32) -> (i32, i32, i32) {
    %c0_i32 = arith.constant 0 : i32
    %c0_i32_0 = arith.constant 0 : i32
    %c0_i32_1 = arith.constant 0 : i32
    return %arg0, %c0_i32, %c0_i32_0 : i32, i32, i32
  }
  func.func @transform_9(%arg0: i32) -> (i32, i32, i32) {
    %c0_i32 = arith.constant 0 : i32
    %c0_i32_0 = arith.constant 0 : i32
    %c0_i32_1 = arith.constant 0 : i32
    return %arg0, %c0_i32, %c0_i32_0 : i32, i32, i32
  }
  func.func @transform_10(%arg0: i32) -> (i32, i32, i32) {
    %c0_i32 = arith.constant 0 : i32
    %c0_i32_0 = arith.constant 0 : i32
    %c0_i32_1 = arith.constant 0 : i32
    return %arg0, %c0_i32, %c0_i32_0 : i32, i32, i32
  }
  func.func @transform_11(%arg0: i32) -> (i32, i32, i32) {
    %c0_i32 = arith.constant 0 : i32
    %c0_i32_0 = arith.constant 0 : i32
    %c0_i32_1 = arith.constant 0 : i32
    return %arg0, %c0_i32, %c0_i32_0 : i32, i32, i32
  }
  func.func @transform_12(%arg0: i32) -> (i32, i32) {
    %c0_i32 = arith.constant 0 : i32
    %c0_i32_0 = arith.constant 0 : i32
    %c0_i32_1 = arith.constant 0 : i32
    return %c0_i32, %c0_i32_0 : i32, i32
  }
}

</mosaic_0001>

<llo_original>
// kernel: transformer_forward.1
$region0: #{transformer_forward.1}
  #allocation0 [shape = 'u32[]', space=smem, size = 0x4, offset = 0x4, fixed_abs, tag = 'smem constant byte address 0x4 - core index']
  #allocation1 [shape = 'u32[144,128]{1,0:T(1,128)}', space=vmem, size = 0x12000, scoped, tag = 'internal scratch']
  #allocation2 [shape = 'f32[34,32]{1,0:T(8,128)}', space=vmem, size = 0x5000, scoped, tag = 'scratch operand']
  %s0 = inlined_call_operand.vmem [shape: f32[34,32], index: 0, kind: input, shape index: {}]
  %s1 = inlined_call_operand.vmem [shape: f32[2,1,32], index: 1, kind: input, shape index: {}]
  %s2 = inlined_call_operand.vmem [shape: f32[2,1,32], index: 2, kind: input, shape index: {}]
  %s3 = inlined_call_operand.vmem [shape: bf16[2,32,96], index: 3, kind: input, shape index: {}]
  %s4 = inlined_call_operand.vmem [shape: bf16[2,32,32], index: 4, kind: input, shape index: {}]
  %s5 = inlined_call_operand.vmem [shape: f32[2,1,32], index: 5, kind: input, shape index: {}]
  %s6 = inlined_call_operand.vmem [shape: f32[2,1,32], index: 6, kind: input, shape index: {}]
  %s7 = inlined_call_operand.vmem [shape: f32[2,1,32], index: 7, kind: input, shape index: {}]
  %s8 = inlined_call_operand.vmem [shape: bf16[2,32,64], index: 8, kind: input, shape index: {}]
  %s9 = inlined_call_operand.vmem [shape: f32[2,1,64], index: 9, kind: input, shape index: {}]
  %s10 = inlined_call_operand.vmem [shape: bf16[2,64,32], index: 10, kind: input, shape index: {}]
  %s11 = inlined_call_operand.vmem [shape: f32[2,1,32], index: 11, kind: input, shape index: {}]
  %s12 = inlined_call_operand.vmem [shape: f32[34,32], index: 12, kind: output, shape index: {}]
  %s13 = sld [smem:[#allocation0]]
  $region85: #{transformer_forward.1} parent=0
    _
  %s15 = ssub.s32 1, %s13
  %s16 = scalar_select 0, %s15, %s13
  loop: start=0, step=1, limit=4
  $region2: #{transformer_forward.1} parent=0 // loop_pre_header
    _
  $region3: #{transformer_forward.1} parent=0 // loop_header
    %s18 = sphi 0, %s22
    %p19 = scmp.ge.s32.totalorder %s18, 4
    %s26 = sphi 0, %s26
    %s28 = sphi 0, %s26
    %s29 = sphi 0, %s28
    %s43 = sphi 0, %s29
    %s49 = sphi 0, %s51
    %s52 = sphi 0, %s49
    %s53 = sphi 0, %s52
    %s69 = sphi 0, %s53
    %s75 = sphi 0, %s77
    %s78 = sphi 0, %s75
    %s79 = sphi 0, %s78
    %s95 = sphi 0, %s79
    %s101 = sphi 0, %s103
    %s104 = sphi 0, %s101
    %s105 = sphi 0, %s104
    %s121 = sphi 0, %s105
    %s127 = sphi 0, %s129
    %s130 = sphi 0, %s127
    %s131 = sphi 0, %s130
    %s147 = sphi 0, %s131
    %s153 = sphi 0, %s155
    %s156 = sphi 0, %s153
    %s157 = sphi 0, %s156
    %s173 = sphi 0, %s157
    %s179 = sphi 0, %s181
    %s182 = sphi 0, %s179
    %s183 = sphi 0, %s182
    %s199 = sphi 0, %s183
    %s205 = sphi 0, %s207
    %s208 = sphi 0, %s205
    %s209 = sphi 0, %s208
    %s225 = sphi 0, %s209
    %s231 = sphi 0, %s233
    %s234 = sphi 0, %s231
    %s235 = sphi 0, %s234
    %s251 = sphi 0, %s235
    %s257 = sphi 0, %s259
    %s260 = sphi 0, %s257
    %s261 = sphi 0, %s260
    %s277 = sphi 0, %s261
    %s283 = sphi 0, %s285
    %s286 = sphi 0, %s283
    %s287 = sphi 0, %s286
    %s303 = sphi 0, %s287
    %s309 = sphi 0, %s311
    %s312 = sphi 0, %s309
    %s313 = sphi 0, %s312
    %s329 = sphi 0, %s313
    %s333 = sphi 0, %s333
    %s335 = sphi 0, %s333
    %s336 = sphi 0, %s335
    %s350 = sphi 0, %s336
  $region4: #{transformer_forward.1} parent=0 // loop_header_branch
    %21 = sbr.rel (%p19) target = $region8
  $region5: #{transformer_forward.1} parent=0 // loop_body
    %s23 = ssub.s32 %s18, 1
    %s24 = ssub.s32 %s18, 2
    %s25 = sadd.s32 %s18, 1
    %s27 = sadd.s32 %s26, 1
    %p30 = scmp.eq.s32.totalorder %s18, 1
    %p31 = scmp.ne.s32.totalorder %s26, %s28
    %p32 = scmp.eq.s32.totalorder %s18, 0
    %p33 = por %p31, %p32
    %p34 = scmp.ne.s32.totalorder %s26, %s28
    %p35 = scmp.eq.s32.totalorder %s23, 1
    %p36 = por %p34, %p35
    %p37 = scmp.ne.s32.totalorder %s28, %s29
    %p38 = scmp.eq.s32.totalorder %s23, 0
    %p39 = por %p37, %p38
    %p40 = scmp.ne.s32.totalorder %s28, %s29
    %p41 = scmp.eq.s32.totalorder %s24, 1
    %p42 = por %p40, %p41
    %p44 = scmp.ne.s32.totalorder %s29, %s43
    %p45 = scmp.eq.s32.totalorder %s24, 0
    %p46 = por %p44, %p45
    %s47 = ssub.s32 %s18, %s25
    %p48 = scmp.eq.s32.totalorder %s47, 0
    %s50 = sadd.s32 %s49, 1
    %s51 = scalar_select %p48, %s49, %s50
    %p54 = pneg %p48
    %p55 = scmp.eq.s32.totalorder %s18, 1
    %p56 = por %p54, %p55
    %p57 = scmp.ne.s32.totalorder %s49, %s52
    %p58 = scmp.eq.s32.totalorder %s18, 0
    %p59 = por %p57, %p58
    %p60 = scmp.ne.s32.totalorder %s49, %s52
    %p61 = scmp.eq.s32.totalorder %s23, 1
    %p62 = por %p60, %p61
    %p63 = scmp.ne.s32.totalorder %s52, %s53
    %p64 = scmp.eq.s32.totalorder %s23, 0
    %p65 = por %p63, %p64
    %p66 = scmp.ne.s32.totalorder %s52, %s53
    %p67 = scmp.eq.s32.totalorder %s24, 1
    %p68 = por %p66, %p67
    %p70 = scmp.ne.s32.totalorder %s53, %s69
    %p71 = scmp.eq.s32.totalorder %s24, 0
    %p72 = por %p70, %p71
    %s73 = ssub.s32 %s18, %s25
    %p74 = scmp.eq.s32.totalorder %s73, 0
    %s76 = sadd.s32 %s75, 1
    %s77 = scalar_select %p74, %s75, %s76
    %p80 = pneg %p74
    %p81 = scmp.eq.s32.totalorder %s18, 1
    %p82 = por %p80, %p81
    %p83 = scmp.ne.s32.totalorder %s75, %s78
    %p84 = scmp.eq.s32.totalorder %s18, 0
    %p85 = por %p83, %p84
    %p86 = scmp.ne.s32.totalorder %s75, %s78
    %p87 = scmp.eq.s32.totalorder %s23, 1
    %p88 = por %p86, %p87
    %p89 = scmp.ne.s32.totalorder %s78, %s79
    %p90 = scmp.eq.s32.totalorder %s23, 0
    %p91 = por %p89, %p90
    %p92 = scmp.ne.s32.totalorder %s78, %s79
    %p93 = scmp.eq.s32.totalorder %s24, 1
    %p94 = por %p92, %p93
    %p96 = scmp.ne.s32.totalorder %s79, %s95
    %p97 = scmp.eq.s32.totalorder %s24, 0
    %p98 = por %p96, %p97
    %s99 = ssub.s32 %s18, %s25
    %p100 = scmp.eq.s32.totalorder %s99, 0
    %s102 = sadd.s32 %s101, 1
    %s103 = scalar_select %p100, %s101, %s102
    %p106 = pneg %p100
    %p107 = scmp.eq.s32.totalorder %s18, 1
    %p108 = por %p106, %p107
    %p109 = scmp.ne.s32.totalorder %s101, %s104
    %p110 = scmp.eq.s32.totalorder %s18, 0
    %p111 = por %p109, %p110
    %p112 = scmp.ne.s32.totalorder %s101, %s104
    %p113 = scmp.eq.s32.totalorder %s23, 1
    %p114 = por %p112, %p113
    %p115 = scmp.ne.s32.totalorder %s104, %s105
    %p116 = scmp.eq.s32.totalorder %s23, 0
    %p117 = por %p115, %p116
    %p118 = scmp.ne.s32.totalorder %s104, %s105
    %p119 = scmp.eq.s32.totalorder %s24, 1
    %p120 = por %p118, %p119
    %p122 = scmp.ne.s32.totalorder %s105, %s121
    %p123 = scmp.eq.s32.totalorder %s24, 0
    %p124 = por %p122, %p123
    %s125 = ssub.s32 %s18, %s25
    %p126 = scmp.eq.s32.totalorder %s125, 0
    %s128 = sadd.s32 %s127, 1
    %s129 = scalar_select %p126, %s127, %s128
    %p132 = pneg %p126
    %p133 = scmp.eq.s32.totalorder %s18, 1
    %p134 = por %p132, %p133
    %p135 = scmp.ne.s32.totalorder %s127, %s130
    %p136 = scmp.eq.s32.totalorder %s18, 0
    %p137 = por %p135, %p136
    %p138 = scmp.ne.s32.totalorder %s127, %s130
    %p139 = scmp.eq.s32.totalorder %s23, 1
    %p140 = por %p138, %p139
    %p141 = scmp.ne.s32.totalorder %s130, %s131
    %p142 = scmp.eq.s32.totalorder %s23, 0
    %p143 = por %p141, %p142
    %p144 = scmp.ne.s32.totalorder %s130, %s131
    %p145 = scmp.eq.s32.totalorder %s24, 1
    %p146 = por %p144, %p145
    %p148 = scmp.ne.s32.totalorder %s131, %s147
    %p149 = scmp.eq.s32.totalorder %s24, 0
    %p150 = por %p148, %p149
    %s151 = ssub.s32 %s18, %s25
    %p152 = scmp.eq.s32.totalorder %s151, 0
    %s154 = sadd.s32 %s153, 1
    %s155 = scalar_select %p152, %s153, %s154
    %p158 = pneg %p152
    %p159 = scmp.eq.s32.totalorder %s18, 1
    %p160 = por %p158, %p159
    %p161 = scmp.ne.s32.totalorder %s153, %s156
    %p162 = scmp.eq.s32.totalorder %s18, 0
    %p163 = por %p161, %p162
    %p164 = scmp.ne.s32.totalorder %s153, %s156
    %p165 = scmp.eq.s32.totalorder %s23, 1
    %p166 = por %p164, %p165
    %p167 = scmp.ne.s32.totalorder %s156, %s157
    %p168 = scmp.eq.s32.totalorder %s23, 0
    %p169 = por %p167, %p168
    %p170 = scmp.ne.s32.totalorder %s156, %s157
    %p171 = scmp.eq.s32.totalorder %s24, 1
    %p172 = por %p170, %p171
    %p174 = scmp.ne.s32.totalorder %s157, %s173
    %p175 = scmp.eq.s32.totalorder %s24, 0
    %p176 = por %p174, %p175
    %s177 = ssub.s32 %s18, %s25
    %p178 = scmp.eq.s32.totalorder %s177, 0
    %s180 = sadd.s32 %s179, 1
    %s181 = scalar_select %p178, %s179, %s180
    %p184 = pneg %p178
    %p185 = scmp.eq.s32.totalorder %s18, 1
    %p186 = por %p184, %p185
    %p187 = scmp.ne.s32.totalorder %s179, %s182
    %p188 = scmp.eq.s32.totalorder %s18, 0
    %p189 = por %p187, %p188
    %p190 = scmp.ne.s32.totalorder %s179, %s182
    %p191 = scmp.eq.s32.totalorder %s23, 1
    %p192 = por %p190, %p191
    %p193 = scmp.ne.s32.totalorder %s182, %s183
    %p194 = scmp.eq.s32.totalorder %s23, 0
    %p195 = por %p193, %p194
    %p196 = scmp.ne.s32.totalorder %s182, %s183
    %p197 = scmp.eq.s32.totalorder %s24, 1
    %p198 = por %p196, %p197
    %p200 = scmp.ne.s32.totalorder %s183, %s199
    %p201 = scmp.eq.s32.totalorder %s24, 0
    %p202 = por %p200, %p201
    %s203 = ssub.s32 %s18, %s25
    %p204 = scmp.eq.s32.totalorder %s203, 0
    %s206 = sadd.s32 %s205, 1
    %s207 = scalar_select %p204, %s205, %s206
    %p210 = pneg %p204
    %p211 = scmp.eq.s32.totalorder %s18, 1
    %p212 = por %p210, %p211
    %p213 = scmp.ne.s32.totalorder %s205, %s208
    %p214 = scmp.eq.s32.totalorder %s18, 0
    %p215 = por %p213, %p214
    %p216 = scmp.ne.s32.totalorder %s205, %s208
    %p217 = scmp.eq.s32.totalorder %s23, 1
    %p218 = por %p216, %p217
    %p219 = scmp.ne.s32.totalorder %s208, %s209
    %p220 = scmp.eq.s32.totalorder %s23, 0
    %p221 = por %p219, %p220
    %p222 = scmp.ne.s32.totalorder %s208, %s209
    %p223 = scmp.eq.s32.totalorder %s24, 1
    %p224 = por %p222, %p223
    %p226 = scmp.ne.s32.totalorder %s209, %s225
    %p227 = scmp.eq.s32.totalorder %s24, 0
    %p228 = por %p226, %p227
    %s229 = ssub.s32 %s18, %s25
    %p230 = scmp.eq.s32.totalorder %s229, 0
    %s232 = sadd.s32 %s231, 1
    %s233 = scalar_select %p230, %s231, %s232
    %p236 = pneg %p230
    %p237 = scmp.eq.s32.totalorder %s18, 1
    %p238 = por %p236, %p237
    %p239 = scmp.ne.s32.totalorder %s231, %s234
    %p240 = scmp.eq.s32.totalorder %s18, 0
    %p241 = por %p239, %p240
    %p242 = scmp.ne.s32.totalorder %s231, %s234
    %p243 = scmp.eq.s32.totalorder %s23, 1
    %p244 = por %p242, %p243
    %p245 = scmp.ne.s32.totalorder %s234, %s235
    %p246 = scmp.eq.s32.totalorder %s23, 0
    %p247 = por %p245, %p246
    %p248 = scmp.ne.s32.totalorder %s234, %s235
    %p249 = scmp.eq.s32.totalorder %s24, 1
    %p250 = por %p248, %p249
    %p252 = scmp.ne.s32.totalorder %s235, %s251
    %p253 = scmp.eq.s32.totalorder %s24, 0
    %p254 = por %p252, %p253
    %s255 = ssub.s32 %s18, %s25
    %p256 = scmp.eq.s32.totalorder %s255, 0
    %s258 = sadd.s32 %s257, 1
    %s259 = scalar_select %p256, %s257, %s258
    %p262 = pneg %p256
    %p263 = scmp.eq.s32.totalorder %s18, 1
    %p264 = por %p262, %p263
    %p265 = scmp.ne.s32.totalorder %s257, %s260
    %p266 = scmp.eq.s32.totalorder %s18, 0
    %p267 = por %p265, %p266
    %p268 = scmp.ne.s32.totalorder %s257, %s260
    %p269 = scmp.eq.s32.totalorder %s23, 1
    %p270 = por %p268, %p269
    %p271 = scmp.ne.s32.totalorder %s260, %s261
    %p272 = scmp.eq.s32.totalorder %s23, 0
    %p273 = por %p271, %p272
    %p274 = scmp.ne.s32.totalorder %s260, %s261
    %p275 = scmp.eq.s32.totalorder %s24, 1
    %p276 = por %p274, %p275
    %p278 = scmp.ne.s32.totalorder %s261, %s277
    %p279 = scmp.eq.s32.totalorder %s24, 0
    %p280 = por %p278, %p279
    %s281 = ssub.s32 %s18, %s25
    %p282 = scmp.eq.s32.totalorder %s281, 0
    %s284 = sadd.s32 %s283, 1
    %s285 = scalar_select %p282, %s283, %s284
    %p288 = pneg %p282
    %p289 = scmp.eq.s32.totalorder %s18, 1
    %p290 = por %p288, %p289
    %p291 = scmp.ne.s32.totalorder %s283, %s286
    %p292 = scmp.eq.s32.totalorder %s18, 0
    %p293 = por %p291, %p292
    %p294 = scmp.ne.s32.totalorder %s283, %s286
    %p295 = scmp.eq.s32.totalorder %s23, 1
    %p296 = por %p294, %p295
    %p297 = scmp.ne.s32.totalorder %s286, %s287
    %p298 = scmp.eq.s32.totalorder %s23, 0
    %p299 = por %p297, %p298
    %p300 = scmp.ne.s32.totalorder %s286, %s287
    %p301 = scmp.eq.s32.totalorder %s24, 1
    %p302 = por %p300, %p301
    %p304 = scmp.ne.s32.totalorder %s287, %s303
    %p305 = scmp.eq.s32.totalorder %s24, 0
    %p306 = por %p304, %p305
    %s307 = ssub.s32 %s18, %s25
    %p308 = scmp.eq.s32.totalorder %s307, 0
    %s310 = sadd.s32 %s309, 1
    %s311 = scalar_select %p308, %s309, %s310
    %p314 = pneg %p308
    %p315 = scmp.eq.s32.totalorder %s18, 1
    %p316 = por %p314, %p315
    %p317 = scmp.ne.s32.totalorder %s309, %s312
    %p318 = scmp.eq.s32.totalorder %s18, 0
    %p319 = por %p317, %p318
    %p320 = scmp.ne.s32.totalorder %s309, %s312
    %p321 = scmp.eq.s32.totalorder %s23, 1
    %p322 = por %p320, %p321
    %p323 = scmp.ne.s32.totalorder %s312, %s313
    %p324 = scmp.eq.s32.totalorder %s23, 0
    %p325 = por %p323, %p324
    %p326 = scmp.ne.s32.totalorder %s312, %s313
    %p327 = scmp.eq.s32.totalorder %s24, 1
    %p328 = por %p326, %p327
    %p330 = scmp.ne.s32.totalorder %s313, %s329
    %p331 = scmp.eq.s32.totalorder %s24, 0
    %p332 = por %p330, %p331
    %s334 = sadd.s32 %s333, 1
    %p337 = scmp.eq.s32.totalorder %s18, 1
    %p338 = scmp.ne.s32.totalorder %s333, %s335
    %p339 = scmp.eq.s32.totalorder %s18, 0
    %p340 = por %p338, %p339
    %p341 = scmp.ne.s32.totalorder %s333, %s335
    %p342 = scmp.eq.s32.totalorder %s23, 1
    %p343 = por %p341, %p342
    %p344 = scmp.ne.s32.totalorder %s335, %s336
    %p345 = scmp.eq.s32.totalorder %s23, 0
    %p346 = por %p344, %p345
    %p347 = scmp.ne.s32.totalorder %s335, %s336
    %p348 = scmp.eq.s32.totalorder %s24, 1
    %p349 = por %p347, %p348
    %p351 = scmp.ne.s32.totalorder %s336, %s350
    %p352 = scmp.eq.s32.totalorder %s24, 0
    %p353 = por %p351, %p352
    %p354 = scmp.le.s32.totalorder 1, %s18
    %p355 = scmp.lt.s32.totalorder %s18, 3
    %p356 = pnand %p354, %p355
    %p357 = pneg %p356
    // Predicated region
    $region9: #{transformer_forward.1} parent=5 // pred_check
      _
    $region10: #{transformer_forward.1} parent=5 // pred_check_branch
      %359 = sbr.rel (%p356) target = $region12
    $region11: #{transformer_forward.1} parent=5 // pred_region
      %s360 = ssub.s32 %s18, 1
      // Predicated region
      $region13: #{transformer_forward.1} parent=11 // pred_check
        %p361 = pneg %p39
      $region14: #{transformer_forward.1} parent=11 // pred_check_branch
        %363 = sbr.rel (%p361) target = $region16
      $region15: #{transformer_forward.1} parent=11 // pred_region
        _
      $region16: #{transformer_forward.1} parent=11 // pred_fallthru
        _
    $region12: #{transformer_forward.1} parent=5 // pred_fallthru
      _
    %p364 = scmp.lt.s32.totalorder %s18, 2
    // Predicated region
    $region17: #{transformer_forward.1} parent=5 // pred_check
      %p365 = pneg %p364
    $region18: #{transformer_forward.1} parent=5 // pred_check_branch
      %367 = sbr.rel (%p365) target = $region20
    $region19: #{transformer_forward.1} parent=5 // pred_region
      // Predicated region
      $region21: #{transformer_forward.1} parent=19 // pred_check
        %p368 = pneg %p59
      $region22: #{transformer_forward.1} parent=19 // pred_check_branch
        %370 = sbr.rel (%p368) target = $region24
      $region23: #{transformer_forward.1} parent=19 // pred_region
        %p371 = scmp.lt.s32.totalorder %s18, 1
        %s372 = scalar_select %p371, %s18, 1
        %s373 = scalar_lea.vmem %s1, %s372
      $region24: #{transformer_forward.1} parent=19 // pred_fallthru
        _
      // Predicated region
      $region25: #{transformer_forward.1} parent=19 // pred_check
        %p374 = pneg %p85
      $region26: #{transformer_forward.1} parent=19 // pred_check_branch
        %376 = sbr.rel (%p374) target = $region28
      $region27: #{transformer_forward.1} parent=19 // pred_region
        %p377 = scmp.lt.s32.totalorder %s18, 1
        %s378 = scalar_select %p377, %s18, 1
        %s379 = scalar_lea.vmem %s2, %s378
      $region28: #{transformer_forward.1} parent=19 // pred_fallthru
        _
      // Predicated region
      $region29: #{transformer_forward.1} parent=19 // pred_check
        %p380 = pneg %p111
      $region30: #{transformer_forward.1} parent=19 // pred_check_branch
        %382 = sbr.rel (%p380) target = $region32
      $region31: #{transformer_forward.1} parent=19 // pred_region
        %p383 = scmp.lt.s32.totalorder %s18, 1
        %s384 = scalar_select %p383, %s18, 1
        %s385 = smul.addr %s384, 4
        %s386 = smul.addr %s385, 4
        %s387 = scalar_lea.vmem %s3, %s386
      $region32: #{transformer_forward.1} parent=19 // pred_fallthru
        _
      // Predicated region
      $region33: #{transformer_forward.1} parent=19 // pred_check
        %p388 = pneg %p137
      $region34: #{transformer_forward.1} parent=19 // pred_check_branch
        %390 = sbr.rel (%p388) target = $region36
      $region35: #{transformer_forward.1} parent=19 // pred_region
        %p391 = scmp.lt.s32.totalorder %s18, 1
        %s392 = scalar_select %p391, %s18, 1
        %s393 = smul.addr %s392, 4
        %s394 = smul.addr %s393, 4
        %s395 = scalar_lea.vmem %s4, %s394
      $region36: #{transformer_forward.1} parent=19 // pred_fallthru
        _
      // Predicated region
      $region37: #{transformer_forward.1} parent=19 // pred_check
        %p396 = pneg %p163
      $region38: #{transformer_forward.1} parent=19 // pred_check_branch
        %398 = sbr.rel (%p396) target = $region40
      $region39: #{transformer_forward.1} parent=19 // pred_region
        %p399 = scmp.lt.s32.totalorder %s18, 1
        %s400 = scalar_select %p399, %s18, 1
        %s401 = scalar_lea.vmem %s5, %s400
      $region40: #{transformer_forward.1} parent=19 // pred_fallthru
        _
      // Predicated region
      $region41: #{transformer_forward.1} parent=19 // pred_check
        %p402 = pneg %p189
      $region42: #{transformer_forward.1} parent=19 // pred_check_branch
        %404 = sbr.rel (%p402) target = $region44
      $region43: #{transformer_forward.1} parent=19 // pred_region
        %p405 = scmp.lt.s32.totalorder %s18, 1
        %s406 = scalar_select %p405, %s18, 1
        %s407 = scalar_lea.vmem %s6, %s406
      $region44: #{transformer_forward.1} parent=19 // pred_fallthru
        _
      // Predicated region
      $region45: #{transformer_forward.1} parent=19 // pred_check
        %p408 = pneg %p215
      $region46: #{transformer_forward.1} parent=19 // pred_check_branch
        %410 = sbr.rel (%p408) target = $region48
      $region47: #{transformer_forward.1} parent=19 // pred_region
        %p411 = scmp.lt.s32.totalorder %s18, 1
        %s412 = scalar_select %p411, %s18, 1
        %s413 = scalar_lea.vmem %s7, %s412
      $region48: #{transformer_forward.1} parent=19 // pred_fallthru
        _
      // Predicated region
      $region49: #{transformer_forward.1} parent=19 // pred_check
        %p414 = pneg %p241
      $region50: #{transformer_forward.1} parent=19 // pred_check_branch
        %416 = sbr.rel (%p414) target = $region52
      $region51: #{transformer_forward.1} parent=19 // pred_region
        %p417 = scmp.lt.s32.totalorder %s18, 1
        %s418 = scalar_select %p417, %s18, 1
        %s419 = smul.addr %s418, 4
        %s420 = smul.addr %s419, 4
        %s421 = scalar_lea.vmem %s8, %s420
      $region52: #{transformer_forward.1} parent=19 // pred_fallthru
        _
      // Predicated region
      $region53: #{transformer_forward.1} parent=19 // pred_check
        %p422 = pneg %p267
      $region54: #{transformer_forward.1} parent=19 // pred_check_branch
        %424 = sbr.rel (%p422) target = $region56
      $region55: #{transformer_forward.1} parent=19 // pred_region
        %p425 = scmp.lt.s32.totalorder %s18, 1
        %s426 = scalar_select %p425, %s18, 1
        %s427 = scalar_lea.vmem %s9, %s426
      $region56: #{transformer_forward.1} parent=19 // pred_fallthru
        _
      // Predicated region
      $region57: #{transformer_forward.1} parent=19 // pred_check
        %p428 = pneg %p293
      $region58: #{transformer_forward.1} parent=19 // pred_check_branch
        %430 = sbr.rel (%p428) target = $region60
      $region59: #{transformer_forward.1} parent=19 // pred_region
        %p431 = scmp.lt.s32.totalorder %s18, 1
        %s432 = scalar_select %p431, %s18, 1
        %s433 = smul.addr %s432, 8
        %s434 = smul.addr %s433, 4
        %s435 = scalar_lea.vmem %s10, %s434
      $region60: #{transformer_forward.1} parent=19 // pred_fallthru
        _
      // Predicated region
      $region61: #{transformer_forward.1} parent=19 // pred_check
        %p436 = pneg %p319
      $region62: #{transformer_forward.1} parent=19 // pred_check_branch
        %438 = sbr.rel (%p436) target = $region64
      $region63: #{transformer_forward.1} parent=19 // pred_region
        %p439 = scmp.lt.s32.totalorder %s18, 1
        %s440 = scalar_select %p439, %s18, 1
        %s441 = scalar_lea.vmem %s11, %s440
      $region64: #{transformer_forward.1} parent=19 // pred_fallthru
        _
    $region20: #{transformer_forward.1} parent=5 // pred_fallthru
      _
    %p442 = scmp.le.s32.totalorder 1, %s18
    %p443 = scmp.lt.s32.totalorder %s18, 3
    %p444 = pnand %p442, %p443
    %p445 = pneg %p444
    // Predicated region
    $region65: #{transformer_forward.1} parent=5 // pred_check
      _
    $region66: #{transformer_forward.1} parent=5 // pred_check_branch
      %447 = sbr.rel (%p444) target = $region68
    $region67: #{transformer_forward.1} parent=5 // pred_region
      %s448 = ssub.s32 %s18, 1
      %p449 = pneg %p39
      %p450 = pneg %p36
      %p451 = scmp.lt.s32.totalorder %s23, 1
      %s452 = scalar_select %p451, %s23, 1
      %s453 = scalar_lea.vmem %s1, %s452
      %p454 = pneg %p65
      %p455 = pneg %p62
      %p456 = scmp.lt.s32.totalorder %s23, 1
      %s457 = scalar_select %p456, %s23, 1
      %s458 = scalar_lea.vmem %s2, %s457
      %p459 = pneg %p91
      %p460 = pneg %p88
      %p461 = scmp.lt.s32.totalorder %s23, 1
      %s462 = scalar_select %p461, %s23, 1
      %s463 = smul.addr %s462, 4
      %s464 = smul.addr %s463, 4
      %s465 = scalar_lea.vmem %s3, %s464
      %p466 = pneg %p117
      %p467 = pneg %p114
      %p468 = scmp.lt.s32.totalorder %s23, 1
      %s469 = scalar_select %p468, %s23, 1
      %s470 = smul.addr %s469, 4
      %s471 = smul.addr %s470, 4
      %s472 = scalar_lea.vmem %s4, %s471
      %p473 = pneg %p143
      %p474 = pneg %p140
      %p475 = scmp.lt.s32.totalorder %s23, 1
      %s476 = scalar_select %p475, %s23, 1
      %s477 = scalar_lea.vmem %s5, %s476
      %p478 = pneg %p169
      %p479 = pneg %p166
      %p480 = scmp.lt.s32.totalorder %s23, 1
      %s481 = scalar_select %p480, %s23, 1
      %s482 = scalar_lea.vmem %s6, %s481
      %p483 = pneg %p195
      %p484 = pneg %p192
      %p485 = scmp.lt.s32.totalorder %s23, 1
      %s486 = scalar_select %p485, %s23, 1
      %s487 = scalar_lea.vmem %s7, %s486
      %p488 = pneg %p221
      %p489 = pneg %p218
      %p490 = scmp.lt.s32.totalorder %s23, 1
      %s491 = scalar_select %p490, %s23, 1
      %s492 = smul.addr %s491, 4
      %s493 = smul.addr %s492, 4
      %s494 = scalar_lea.vmem %s8, %s493
      %p495 = pneg %p247
      %p496 = pneg %p244
      %p497 = scmp.lt.s32.totalorder %s23, 1
      %s498 = scalar_select %p497, %s23, 1
      %s499 = scalar_lea.vmem %s9, %s498
      %p500 = pneg %p273
      %p501 = pneg %p270
      %p502 = scmp.lt.s32.totalorder %s23, 1
      %s503 = scalar_select %p502, %s23, 1
      %s504 = smul.addr %s503, 8
      %s505 = smul.addr %s504, 4
      %s506 = scalar_lea.vmem %s10, %s505
      %p507 = pneg %p299
      %p508 = pneg %p296
      %p509 = scmp.lt.s32.totalorder %s23, 1
      %s510 = scalar_select %p509, %s23, 1
      %s511 = scalar_lea.vmem %s11, %s510
      %p512 = pneg %p325
      %p513 = pneg %p322
      %p514 = pneg %p346
      %p515 = pneg %p343
      %p516 = scmp.lt.s32.totalorder %s23, 1
      %s517 = scalar_select %p516, %s23, 1
      %s518 = scalar_lea.vmem %s1, %s517
      %p519 = scmp.lt.s32.totalorder %s23, 1
      %s520 = scalar_select %p519, %s23, 1
      %s521 = scalar_lea.vmem %s2, %s520
      %p522 = scmp.lt.s32.totalorder %s23, 1
      %s523 = scalar_select %p522, %s23, 1
      %s524 = smul.addr %s523, 4
      %s525 = smul.addr %s524, 4
      %s526 = scalar_lea.vmem %s3, %s525
      %p527 = scmp.lt.s32.totalorder %s23, 1
      %s528 = scalar_select %p527, %s23, 1
      %s529 = smul.addr %s528, 4
      %s530 = smul.addr %s529, 4
      %s531 = scalar_lea.vmem %s4, %s530
      %p532 = scmp.lt.s32.totalorder %s23, 1
      %s533 = scalar_select %p532, %s23, 1
      %s534 = scalar_lea.vmem %s5, %s533
      %p535 = scmp.lt.s32.totalorder %s23, 1
      %s536 = scalar_select %p535, %s23, 1
      %s537 = scalar_lea.vmem %s6, %s536
      %p538 = scmp.lt.s32.totalorder %s23, 1
      %s539 = scalar_select %p538, %s23, 1
      %s540 = scalar_lea.vmem %s7, %s539
      %p541 = scmp.lt.s32.totalorder %s23, 1
      %s542 = scalar_select %p541, %s23, 1
      %s543 = smul.addr %s542, 4
      %s544 = smul.addr %s543, 4
      %s545 = scalar_lea.vmem %s8, %s544
      %p546 = scmp.lt.s32.totalorder %s23, 1
      %s547 = scalar_select %p546, %s23, 1
      %s548 = scalar_lea.vmem %s9, %s547
      %p549 = scmp.lt.s32.totalorder %s23, 1
      %s550 = scalar_select %p549, %s23, 1
      %s551 = smul.addr %s550, 8
      %s552 = smul.addr %s551, 4
      %s553 = scalar_lea.vmem %s10, %s552
      %p554 = scmp.lt.s32.totalorder %s23, 1
      %s555 = scalar_select %p554, %s23, 1
      %s556 = scalar_lea.vmem %s11, %s555
      %p558 = scmp.eq.s32.totalorder %s23, 0
      // Predicated region
      $region69: #{transformer_forward.1} parent=67 // pred_check
        %p559 = pneg %p558
      $region70: #{transformer_forward.1} parent=67 // pred_check_branch
        %561 = sbr.rel (%p559) target = $region72
      $region71: #{transformer_forward.1} parent=67 // pred_region
        %v562 = vld [vmem:[%s0] sm:$0xff]
        %v563 = vld [vmem:[%s0 + $0x8] sm:$0xff]
        %v564 = vld [vmem:[%s0 + $0x10] sm:$0xff]
        %v565 = vld [vmem:[%s0 + $0x18] sm:$0xff]
        %v566 = vld [vmem:[%s0 + $0x20] sm:$0x3]
        %vm567 = vcmask 261120
        %568 = vst.msk [vmem:[%s12] sm:$0xff] %vm567, %v562
        %569 = vst.msk [vmem:[%s12 + $0x8] sm:$0xff] %vm567, %v563
        %570 = vst.msk [vmem:[%s12 + $0x10] sm:$0xff] %vm567, %v564
        %571 = vst.msk [vmem:[%s12 + $0x18] sm:$0xff] %vm567, %v565
        %vm572 = vcmask 254976
        %573 = vst.msk [vmem:[%s12 + $0x20] sm:$0x3] %vm572, %v566
      $region72: #{transformer_forward.1} parent=67 // pred_fallthru
        _
      %v574 = vld [vmem:[%s12] sm:$0xff]
      %v575 = vld [vmem:[%s12 + $0x8] sm:$0xff]
      %v576 = vld [vmem:[%s12 + $0x10] sm:$0xff]
      %v577 = vld [vmem:[%s12 + $0x18] sm:$0xff]
      %v578 = vld [vmem:[%s12 + $0x20] sm:$0x3]
      %v579 = vld [vmem:[%s518] sm:$0x1]
      %v580 = vld [vmem:[%s521] sm:$0x1]
      %vm581 = vcmask 261120
      %v582 = vsel %vm581, %v574, 0.0
      %583 = vadd.xlane.f32.xlu0 %v582
      %v584 = vpop.xlane.xlu0 %583
      %v585 = vsel %vm581, %v575, 0.0
      %586 = vadd.xlane.f32.xlu0 %v585
      %v587 = vpop.xlane.xlu0 %586
      %v588 = vsel %vm581, %v576, 0.0
      %589 = vadd.xlane.f32.xlu0 %v588
      %v590 = vpop.xlane.xlu0 %589
      %v591 = vsel %vm581, %v577, 0.0
      %592 = vadd.xlane.f32.xlu0 %v591
      %v593 = vpop.xlane.xlu0 %592
      %vm594 = vcmask 254976
      %v595 = vsel %vm594, %v578, 0.0
      %596 = vadd.xlane.f32.xlu0 %v595
      %v597 = vpop.xlane.xlu0 %596
      %v598 = vrcp.pop 32.0
      %v599 = vmul.f32 %v584, %v598
      %v600 = vmul.f32 %v587, %v598
      %v601 = vmul.f32 %v590, %v598
      %v602 = vmul.f32 %v593, %v598
      %v603 = vmul.f32 %v597, %v598
      %v604 = vsub.f32 %v574, %v599
      %v605 = vsub.f32 %v575, %v600
      %v606 = vsub.f32 %v576, %v601
      %v607 = vsub.f32 %v577, %v602
      %v608 = vsub.f32 %v578, %v603
      %v609 = vmul.f32 %v604, %v604
      %v610 = vmul.f32 %v605, %v605
      %v611 = vmul.f32 %v606, %v606
      %v612 = vmul.f32 %v607, %v607
      %v613 = vmul.f32 %v608, %v608
      %v614 = vsel %vm581, %v609, 0.0
      %615 = vadd.xlane.f32.xlu0 %v614
      %v616 = vpop.xlane.xlu0 %615
      %v617 = vsel %vm581, %v610, 0.0
      %618 = vadd.xlane.f32.xlu0 %v617
      %v619 = vpop.xlane.xlu0 %618
      %v620 = vsel %vm581, %v611, 0.0
      %621 = vadd.xlane.f32.xlu0 %v620
      %v622 = vpop.xlane.xlu0 %621
      %v623 = vsel %vm581, %v612, 0.0
      %624 = vadd.xlane.f32.xlu0 %v623
      %v625 = vpop.xlane.xlu0 %624
      %v626 = vsel %vm594, %v613, 0.0
      %627 = vadd.xlane.f32.xlu0 %v626
      %v628 = vpop.xlane.xlu0 %627
      %v629 = vmul.f32 %v616, %v598
      %v630 = vmul.f32 %v619, %v598
      %v631 = vmul.f32 %v622, %v598
      %v632 = vmul.f32 %v625, %v598
      %v633 = vmul.f32 %v628, %v598
      %v634 = vadd.f32 %v629, 1e-05
      %v635 = vadd.f32 %v630, 1e-05
      %v636 = vadd.f32 %v631, 1e-05
      %v637 = vadd.f32 %v632, 1e-05
      %v638 = vadd.f32 %v633, 1e-05
      %v639 = vrsqrt.pop %v634
      %v640 = vrsqrt.pop %v635
      %v641 = vrsqrt.pop %v636
      %v642 = vrsqrt.pop %v637
      %v643 = vrsqrt.pop %v638
      %v644 = vmul.f32 %v604, %v639
      %v645 = vmul.f32 %v605, %v640
      %v646 = vmul.f32 %v606, %v641
      %v647 = vmul.f32 %v607, %v642
      %v648 = vmul.f32 %v608, %v643
      %v650 = vlaneseq
      %v651 = vshrl.u32 %v650, 7
      %v652 = vsub.s32 0, %v651
      %v653 = vrot.slane %v579, %v652
      %v655 = vmul.f32 %v644, %v653
      %v656 = vmul.f32 %v645, %v653
      %v657 = vmul.f32 %v646, %v653
      %v658 = vmul.f32 %v647, %v653
      %v659 = vmul.f32 %v648, %v653
      %v661 = vlaneseq
      %v662 = vshrl.u32 %v661, 7
      %v663 = vsub.s32 0, %v662
      %v664 = vrot.slane %v580, %v663
      %v666 = vadd.f32 %v655, %v664
      %v667 = vadd.f32 %v656, %v664
      %v668 = vadd.f32 %v657, %v664
      %v669 = vadd.f32 %v658, %v664
      %v670 = vadd.f32 %v659, %v664
      %v671 = vpack.c.bf16 %v667, %v666
      %v672 = vpack.c.bf16 %v669, %v668
      %v673 = vpack.c.bf16 %v670, %v670
      %v674 = vld [vmem:[%s526] sm:$0xf]
      %v675 = vld [vmem:[%s526 + $0x4] sm:$0xf]
      %v676 = vld [vmem:[%s526 + $0x8] sm:$0xf]
      %v677 = vld [vmem:[%s526 + $0xc] sm:$0xf]
      %v682 = vunpack.c.l.b16 %v674
      %v683 = vunpack.c.l.b16 %v675
      %v684 = vunpack.c.l.b16 %v676
      %v685 = vunpack.c.l.b16 %v677
      %v686 = vpack.c.b16 %v683, %v682
      %v687 = vpack.c.b16 %v685, %v684
      %v691 = vsel %vm581, %v671, 0
      %v694 = vsel %vm581, %v672, 0
      %v697 = vsel %vm581, %v673, 0
      %699 = vmatprep.subr.bf16.mxu0 0
      %700 = vmatpush1.bf16.msra.mxu0 %v686
      %701 = vmatprep.subr.bf16.mxu0 0
      %702 = vmatpush1.bf16.msra.mxu0 %v687
      %703 = vmatprep.subr.bf16.mxu0 0
      %704 = vmatpush1.bf16.msra.mxu0 0
      %705 = vmatprep.subr.bf16.mxu0 0
      %706 = vmatpush1.bf16.msra.mxu0 0
      %707 = vmatprep.subr.bf16.mxu0 0
      %708 = vmatpush1.bf16.msra.mxu0 0
      %709 = vmatprep.subr.bf16.mxu0 0
      %710 = vmatpush1.bf16.msra.mxu0 0
      %711 = vmatprep.subr.bf16.mxu0 0
      %712 = vmatpush1.bf16.msra.mxu0 0
      %713 = vmatprep.subr.bf16.mxu0 0
      %714 = vmatpush1.bf16.msra.mxu0 0
      %715 = vmatprep.subr.bf16.mxu0 0
      %716 = vmatpush1.bf16.msra.mxu0 0
      %717 = vmatprep.subr.bf16.mxu0 0
      %718 = vmatpush1.bf16.msra.mxu0 0
      %719 = vmatprep.subr.bf16.mxu0 0
      %720 = vmatpush1.bf16.msra.mxu0 0
      %721 = vmatprep.subr.bf16.mxu0 0
      %722 = vmatpush1.bf16.msra.mxu0 0
      %723 = vmatprep.subr.bf16.mxu0 0
      %724 = vmatpush1.bf16.msra.mxu0 0
      %725 = vmatprep.subr.bf16.mxu0 0
      %726 = vmatpush1.bf16.msra.mxu0 0
      %727 = vmatprep.subr.bf16.mxu0 0
      %728 = vmatpush1.bf16.msra.mxu0 0
      %729 = vmatprep.subr.bf16.mxu0 0
      %730 = vmatpush1.bf16.msra.mxu0 0
      %731 = vmatprep.mubr.bf16.mxu0 0
      %732 = vmatmul.mubr.bf16.gmra.mrb[0].mxu0 %v691
      %v733 = vpop.f32.mrb[0].mxu0
      %v734 = vadd.f32 0.0, %v733
      %v735 = vpop.f32.mrb[0].mxu0
      %v736 = vpop.f32.mrb[0].mxu0
      %v737 = vadd.f32 0.0, %v736
      %v738 = vpop.f32.mrb[0].mxu0
      %739 = vmatprep.mubr.bf16.mxu0 0
      %740 = vmatmul.mubr.bf16.gmra.mrb[0].mxu0 %v694
      %v741 = vpop.f32.mrb[0].mxu0
      %v742 = vadd.f32 0.0, %v741
      %v743 = vpop.f32.mrb[0].mxu0
      %v744 = vpop.f32.mrb[0].mxu0
      %v745 = vadd.f32 0.0, %v744
      %v746 = vpop.f32.mrb[0].mxu0
      %747 = vmatprep.mubr.bf16.mxu0 0
      %748 = vmatmul.mubr.bf16.gmra.mrb[0].mxu0 %v697
      %v749 = vpop.f32.mrb[0].mxu0
      %v750 = vadd.f32 0.0, %v749
      %v751 = vpop.f32.mrb[0].mxu0
      %v752 = vpop.f32.mrb[0].mxu0
      %v753 = vpop.f32.mrb[0].mxu0
      %754 = vdwg.mxu0
      %v755 = vpack.c.bf16 %v737, %v734
      %v756 = vpack.c.bf16 %v745, %v742
      %v757 = vpack.c.bf16 %v750, %v750
      %760 = vrot.lane.b32.xlu0 %v755, 96
      %v761 = vpop.permute.xlu0 %760
      %762 = vrot.lane.b32.xlu0 %v756, 96
      %v763 = vpop.permute.xlu0 %762
      %vm764 = vcmask 130048
      %v766 = vsel %vm764, %v755, 0
      %v769 = vsel %vm764, %v756, 0
      %v772 = vsel %vm764, %v761, 0
      %v775 = vsel %vm764, %v763, 0
      %777 = vmatprep.subr.bf16.mxu0 0
      %778 = vmatpush1.bf16.xpose.msra.mxu0 %v772
      %779 = vmatprep.subr.bf16.mxu0 0
      %780 = vmatpush1.bf16.xpose.msra.mxu0 %v775
      %781 = vmatprep.subr.bf16.mxu0 0
      %782 = vmatpush1.bf16.xpose.msra.mxu0 0
      %783 = vmatprep.subr.bf16.mxu0 0
      %784 = vmatpush1.bf16.xpose.msra.mxu0 0
      %785 = vmatprep.subr.bf16.mxu0 0
      %786 = vmatpush1.bf16.xpose.msra.mxu0 0
      %787 = vmatprep.subr.bf16.mxu0 0
      %788 = vmatpush1.bf16.xpose.msra.mxu0 0
      %789 = vmatprep.subr.bf16.mxu0 0
      %790 = vmatpush1.bf16.xpose.msra.mxu0 0
      %791 = vmatprep.subr.bf16.mxu0 0
      %792 = vmatpush1.bf16.xpose.msra.mxu0 0
      %793 = vmatprep.subr.bf16.mxu0 0
      %794 = vmatpush1.bf16.xpose.msra.mxu0 0
      %795 = vmatprep.subr.bf16.mxu0 0
      %796 = vmatpush1.bf16.xpose.msra.mxu0 0
      %797 = vmatprep.subr.bf16.mxu0 0
      %798 = vmatpush1.bf16.xpose.msra.mxu0 0
      %799 = vmatprep.subr.bf16.mxu0 0
      %800 = vmatpush1.bf16.xpose.msra.mxu0 0
      %801 = vmatprep.subr.bf16.mxu0 0
      %802 = vmatpush1.bf16.xpose.msra.mxu0 0
      %803 = vmatprep.subr.bf16.mxu0 0
      %804 = vmatpush1.bf16.xpose.msra.mxu0 0
      %805 = vmatprep.subr.bf16.mxu0 0
      %806 = vmatpush1.bf16.xpose.msra.mxu0 0
      %807 = vmatprep.subr.bf16.mxu0 0
      %808 = vmatpush1.bf16.xpose.msra.mxu0 0
      %809 = vmatprep.mubr.bf16.mxu0 0
      %810 = vmatmul.mubr.bf16.gmra.mrb[0].mxu0 %v766
      %v811 = vpop.f32.mrb[0].mxu0
      %v812 = vadd.f32 0.0, %v811
      %v813 = vpop.f32.mrb[0].mxu0
      %v814 = vpop.f32.mrb[0].mxu0
      %v815 = vadd.f32 0.0, %v814
      %v816 = vpop.f32.mrb[0].mxu0
      %817 = vmatprep.mubr.bf16.mxu0 0
      %818 = vmatmul.mubr.bf16.gmra.mrb[0].mxu0 %v769
      %v819 = vpop.f32.mrb[0].mxu0
      %v820 = vadd.f32 0.0, %v819
      %v821 = vpop.f32.mrb[0].mxu0
      %v822 = vpop.f32.mrb[0].mxu0
      %v823 = vpop.f32.mrb[0].mxu0
      %824 = vdwg.mxu0
      %v825 = vmul.f32 %v812, 0.25
      %v826 = vmul.f32 %v815, 0.25
      %v827 = vmul.f32 %v820, 0.25
      %vm828 = vcmask 138240
      %v829 = vsel %vm828, %v825, -inf
      %830 = vmax.xlane.f32.xlu0 %v829
      %v831 = vpop.xlane.xlu0 %830
      %v832 = vsel %vm828, %v826, -inf
      %833 = vmax.xlane.f32.xlu0 %v832
      %v834 = vpop.xlane.xlu0 %833
      %vm835 = vcmask 131072
      %v836 = vsel %vm835, %v827, -inf
      %837 = vmax.xlane.f32.xlu0 %v836
      %v838 = vpop.xlane.xlu0 %837
      %v839 = vsub.f32 %v825, %v831
      %v840 = vsub.f32 %v826, %v834
      %v841 = vsub.f32 %v827, %v838
      %v842 = vmul.f32 %v839, 1.442695
      %v843 = vpow.pop %v842
      %v844 = vmul.f32 %v840, 1.442695
      %v845 = vpow.pop %v844
      %v846 = vmul.f32 %v841, 1.442695
      %v847 = vpow.pop %v846
      %v848 = vsel %vm828, %v843, 0.0
      %849 = vadd.xlane.f32.xlu0 %v848
      %v850 = vpop.xlane.xlu0 %849
      %v851 = vsel %vm828, %v845, 0.0
      %852 = vadd.xlane.f32.xlu0 %v851
      %v853 = vpop.xlane.xlu0 %852
      %v854 = vsel %vm835, %v847, 0.0
      %855 = vadd.xlane.f32.xlu0 %v854
      %v856 = vpop.xlane.xlu0 %855
      %v857 = vrcp.pop %v850
      %v858 = vrcp.pop %v853
      %v859 = vrcp.pop %v856
      %v860 = vmul.f32 %v843, %v857
      %v861 = vmul.f32 %v845, %v858
      %v862 = vmul.f32 %v847, %v859
      %v863 = vpack.c.bf16 %v861, %v860
      %v864 = vpack.c.bf16 %v862, %v862
      %865 = vrot.lane.b32.xlu0 %v755, 64
      %v866 = vpop.permute.xlu0 %865
      %867 = vrot.lane.b32.xlu0 %v756, 64
      %v868 = vpop.permute.xlu0 %867
      %v871 = vsel %vm828, %v863, 0
      %v874 = vsel %vm828, %v864, 0
      %vm876 = vcmask 1040384
      %v877 = vsel 0, 4294967295, 65535
      %v878 = vsel %vm876, %v877, 0
      %v880 = vand.u32 %v868, %v878
      %882 = vmatprep.subr.bf16.mxu0 0
      %883 = vmatpush1.bf16.msra.mxu0 %v866
      %884 = vmatprep.subr.bf16.mxu0 0
      %885 = vmatpush1.bf16.msra.mxu0 %v880
      %886 = vmatprep.subr.bf16.mxu0 0
      %887 = vmatpush1.bf16.msra.mxu0 0
      %888 = vmatprep.subr.bf16.mxu0 0
      %889 = vmatpush1.bf16.msra.mxu0 0
      %890 = vmatprep.subr.bf16.mxu0 0
      %891 = vmatpush1.bf16.msra.mxu0 0
      %892 = vmatprep.subr.bf16.mxu0 0
      %893 = vmatpush1.bf16.msra.mxu0 0
      %894 = vmatprep.subr.bf16.mxu0 0
      %895 = vmatpush1.bf16.msra.mxu0 0
      %896 = vmatprep.subr.bf16.mxu0 0
      %897 = vmatpush1.bf16.msra.mxu0 0
      %898 = vmatprep.subr.bf16.mxu0 0
      %899 = vmatpush1.bf16.msra.mxu0 0
      %900 = vmatprep.subr.bf16.mxu0 0
      %901 = vmatpush1.bf16.msra.mxu0 0
      %902 = vmatprep.subr.bf16.mxu0 0
      %903 = vmatpush1.bf16.msra.mxu0 0
      %904 = vmatprep.subr.bf16.mxu0 0
      %905 = vmatpush1.bf16.msra.mxu0 0
      %906 = vmatprep.subr.bf16.mxu0 0
      %907 = vmatpush1.bf16.msra.mxu0 0
      %908 = vmatprep.subr.bf16.mxu0 0
      %909 = vmatpush1.bf16.msra.mxu0 0
      %910 = vmatprep.subr.bf16.mxu0 0
      %911 = vmatpush1.bf16.msra.mxu0 0
      %912 = vmatprep.subr.bf16.mxu0 0
      %913 = vmatpush1.bf16.msra.mxu0 0
      %914 = vmatprep.mubr.bf16.mxu0 0
      %915 = vmatmul.mubr.bf16.gmra.mrb[0].mxu0 %v871
      %v916 = vpop.f32.mrb[0].mxu0
      %v917 = vadd.f32 0.0, %v916
      %v918 = vpop.f32.mrb[0].mxu0
      %v919 = vpop.f32.mrb[0].mxu0
      %v920 = vadd.f32 0.0, %v919
      %v921 = vpop.f32.mrb[0].mxu0
      %922 = vmatprep.mubr.bf16.mxu0 0
      %923 = vmatmul.mubr.bf16.gmra.mrb[0].mxu0 %v874
      %v924 = vpop.f32.mrb[0].mxu0
      %v925 = vadd.f32 0.0, %v924
      %v926 = vpop.f32.mrb[0].mxu0
      %v927 = vpop.f32.mrb[0].mxu0
      %v928 = vpop.f32.mrb[0].mxu0
      %929 = vdwg.mxu0
      %930 = vst.msk [vmem:[#allocation2] sm:$0xff] %vm764, %v917
      %931 = vst.msk [vmem:[#allocation2 + $0x8] sm:$0xff] %vm764, %v920
      %vm932 = vcmask 122880
      %933 = vst.msk [vmem:[#allocation2 + $0x10] sm:$0x1] %vm932, %v925
      %934 = vrot.lane.b32.xlu0 %v755, 112
      %v935 = vpop.permute.xlu0 %934
      %936 = vrot.lane.b32.xlu0 %v756, 112
      %v937 = vpop.permute.xlu0 %936
      %938 = vrot.lane.b32.xlu0 %v755, 80
      %v939 = vpop.permute.xlu0 %938
      %940 = vrot.lane.b32.xlu0 %v756, 80
      %v941 = vpop.permute.xlu0 %940
      %v943 = vsel %vm764, %v935, 0
      %v946 = vsel %vm764, %v937, 0
      %v949 = vsel %vm764, %v939, 0
      %v952 = vsel %vm764, %v941, 0
      %954 = vmatprep.subr.bf16.mxu0 0
      %955 = vmatpush1.bf16.xpose.msra.mxu0 %v949
      %956 = vmatprep.subr.bf16.mxu0 0
      %957 = vmatpush1.bf16.xpose.msra.mxu0 %v952
      %958 = vmatprep.subr.bf16.mxu0 0
      %959 = vmatpush1.bf16.xpose.msra.mxu0 0
      %960 = vmatprep.subr.bf16.mxu0 0
      %961 = vmatpush1.bf16.xpose.msra.mxu0 0
      %962 = vmatprep.subr.bf16.mxu0 0
      %963 = vmatpush1.bf16.xpose.msra.mxu0 0
      %964 = vmatprep.subr.bf16.mxu0 0
      %965 = vmatpush1.bf16.xpose.msra.mxu0 0
      %966 = vmatprep.subr.bf16.mxu0 0
      %967 = vmatpush1.bf16.xpose.msra.mxu0 0
      %968 = vmatprep.subr.bf16.mxu0 0
      %969 = vmatpush1.bf16.xpose.msra.mxu0 0
      %970 = vmatprep.subr.bf16.mxu0 0
      %971 = vmatpush1.bf16.xpose.msra.mxu0 0
      %972 = vmatprep.subr.bf16.mxu0 0
      %973 = vmatpush1.bf16.xpose.msra.mxu0 0
      %974 = vmatprep.subr.bf16.mxu0 0
      %975 = vmatpush1.bf16.xpose.msra.mxu0 0
      %976 = vmatprep.subr.bf16.mxu0 0
      %977 = vmatpush1.bf16.xpose.msra.mxu0 0
      %978 = vmatprep.subr.bf16.mxu0 0
      %979 = vmatpush1.bf16.xpose.msra.mxu0 0
      %980 = vmatprep.subr.bf16.mxu0 0
      %981 = vmatpush1.bf16.xpose.msra.mxu0 0
      %982 = vmatprep.subr.bf16.mxu0 0
      %983 = vmatpush1.bf16.xpose.msra.mxu0 0
      %984 = vmatprep.subr.bf16.mxu0 0
      %985 = vmatpush1.bf16.xpose.msra.mxu0 0
      %986 = vmatprep.mubr.bf16.mxu0 0
      %987 = vmatmul.mubr.bf16.gmra.mrb[0].mxu0 %v943
      %v988 = vpop.f32.mrb[0].mxu0
      %v989 = vadd.f32 0.0, %v988
      %v990 = vpop.f32.mrb[0].mxu0
      %v991 = vpop.f32.mrb[0].mxu0
      %v992 = vadd.f32 0.0, %v991
      %v993 = vpop.f32.mrb[0].mxu0
      %994 = vmatprep.mubr.bf16.mxu0 0
      %995 = vmatmul.mubr.bf16.gmra.mrb[0].mxu0 %v946
      %v996 = vpop.f32.mrb[0].mxu0
      %v997 = vadd.f32 0.0, %v996
      %v998 = vpop.f32.mrb[0].mxu0
      %v999 = vpop.f32.mrb[0].mxu0
      %v1000 = vpop.f32.mrb[0].mxu0
      %1001 = vdwg.mxu0
      %v1002 = vmul.f32 %v989, 0.25
      %v1003 = vmul.f32 %v992, 0.25
      %v1004 = vmul.f32 %v997, 0.25
      %v1005 = vsel %vm828, %v1002, -inf
      %1006 = vmax.xlane.f32.xlu0 %v1005
      %v1007 = vpop.xlane.xlu0 %1006
      %v1008 = vsel %vm828, %v1003, -inf
      %1009 = vmax.xlane.f32.xlu0 %v1008
      %v1010 = vpop.xlane.xlu0 %1009
      %v1011 = vsel %vm835, %v1004, -inf
      %1012 = vmax.xlane.f32.xlu0 %v1011
      %v1013 = vpop.xlane.xlu0 %1012
      %v1014 = vsub.f32 %v1002, %v1007
      %v1015 = vsub.f32 %v1003, %v1010
      %v1016 = vsub.f32 %v1004, %v1013
      %v1017 = vmul.f32 %v1014, 1.442695
      %v1018 = vpow.pop %v1017
      %v1019 = vmul.f32 %v1015, 1.442695
      %v1020 = vpow.pop %v1019
      %v1021 = vmul.f32 %v1016, 1.442695
      %v1022 = vpow.pop %v1021
      %v1023 = vsel %vm828, %v1018, 0.0
      %1024 = vadd.xlane.f32.xlu0 %v1023
      %v1025 = vpop.xlane.xlu0 %1024
      %v1026 = vsel %vm828, %v1020, 0.0
      %1027 = vadd.xlane.f32.xlu0 %v1026
      %v1028 = vpop.xlane.xlu0 %1027
      %v1029 = vsel %vm835, %v1022, 0.0
      %1030 = vadd.xlane.f32.xlu0 %v1029
      %v1031 = vpop.xlane.xlu0 %1030
      %v1032 = vrcp.pop %v1025
      %v1033 = vrcp.pop %v1028
      %v1034 = vrcp.pop %v1031
      %v1035 = vmul.f32 %v1018, %v1032
      %v1036 = vmul.f32 %v1020, %v1033
      %v1037 = vmul.f32 %v1022, %v1034
      %v1038 = vpack.c.bf16 %v1036, %v1035
      %v1039 = vpack.c.bf16 %v1037, %v1037
      %1040 = vrot.lane.b32.xlu0 %v755, 48
      %v1041 = vpop.permute.xlu0 %1040
      %1042 = vrot.lane.b32.xlu0 %v756, 48
      %v1043 = vpop.permute.xlu0 %1042
      %v1046 = vsel %vm828, %v1038, 0
      %v1049 = vsel %vm828, %v1039, 0
      %v1052 = vand.u32 %v1043, %v878
      %1054 = vmatprep.subr.bf16.mxu0 0
      %1055 = vmatpush1.bf16.msra.mxu0 %v1041
      %1056 = vmatprep.subr.bf16.mxu0 0
      %1057 = vmatpush1.bf16.msra.mxu0 %v1052
      %1058 = vmatprep.subr.bf16.mxu0 0
      %1059 = vmatpush1.bf16.msra.mxu0 0
      %1060 = vmatprep.subr.bf16.mxu0 0
      %1061 = vmatpush1.bf16.msra.mxu0 0
      %1062 = vmatprep.subr.bf16.mxu0 0
      %1063 = vmatpush1.bf16.msra.mxu0 0
      %1064 = vmatprep.subr.bf16.mxu0 0
      %1065 = vmatpush1.bf16.msra.mxu0 0
      %1066 = vmatprep.subr.bf16.mxu0 0
      %1067 = vmatpush1.bf16.msra.mxu0 0
      %1068 = vmatprep.subr.bf16.mxu0 0
      %1069 = vmatpush1.bf16.msra.mxu0 0
      %1070 = vmatprep.subr.bf16.mxu0 0
      %1071 = vmatpush1.bf16.msra.mxu0 0
      %1072 = vmatprep.subr.bf16.mxu0 0
      %1073 = vmatpush1.bf16.msra.mxu0 0
      %1074 = vmatprep.subr.bf16.mxu0 0
      %1075 = vmatpush1.bf16.msra.mxu0 0
      %1076 = vmatprep.subr.bf16.mxu0 0
      %1077 = vmatpush1.bf16.msra.mxu0 0
      %1078 = vmatprep.subr.bf16.mxu0 0
      %1079 = vmatpush1.bf16.msra.mxu0 0
      %1080 = vmatprep.subr.bf16.mxu0 0
      %1081 = vmatpush1.bf16.msra.mxu0 0
      %1082 = vmatprep.subr.bf16.mxu0 0
      %1083 = vmatpush1.bf16.msra.mxu0 0
      %1084 = vmatprep.subr.bf16.mxu0 0
      %1085 = vmatpush1.bf16.msra.mxu0 0
      %1086 = vmatprep.mubr.bf16.mxu0 0
      %1087 = vmatmul.mubr.bf16.gmra.mrb[0].mxu0 %v1046
      %v1088 = vpop.f32.mrb[0].mxu0
      %v1089 = vadd.f32 0.0, %v1088
      %v1090 = vpop.f32.mrb[0].mxu0
      %v1091 = vpop.f32.mrb[0].mxu0
      %v1092 = vadd.f32 0.0, %v1091
      %v1093 = vpop.f32.mrb[0].mxu0
      %1094 = vmatprep.mubr.bf16.mxu0 0
      %1095 = vmatmul.mubr.bf16.gmra.mrb[0].mxu0 %v1049
      %v1096 = vpop.f32.mrb[0].mxu0
      %v1097 = vadd.f32 0.0, %v1096
      %v1098 = vpop.f32.mrb[0].mxu0
      %v1099 = vpop.f32.mrb[0].mxu0
      %v1100 = vpop.f32.mrb[0].mxu0
      %1101 = vdwg.mxu0
      %1105 = vrot.lane.b32.xlu0 %v1089, 16
      %v1106 = vpop.permute.xlu0 %1105
      %1107 = vrot.lane.b32.xlu0 %v1092, 16
      %v1108 = vpop.permute.xlu0 %1107
      %1109 = vrot.lane.b32.xlu0 %v1097, 16
      %v1110 = vpop.permute.xlu0 %1109
      %vm1114 = vcmask 261248
      %1115 = vst.msk [vmem:[#allocation2] sm:$0xff] %vm1114, %v1106
      %1116 = vst.msk [vmem:[#allocation2 + $0x8] sm:$0xff] %vm1114, %v1108
      %vm1117 = vcmask 254080
      %1118 = vst.msk [vmem:[#allocation2 + $0x10] sm:$0x1] %vm1117, %v1110
      %vm1119 = vsmask.f32 7424
      %v1120 = vshrl.u32 %v756, 16
      %v1122 = vshll.u32 %v756, 16
      %v1124 = vrot.slane %v1122, 1
      %v1125 = vor.u32 %v1120, %v1124
      %v1127 = vshll.u32 %v757, 16
      %v1129 = vrot.slane %v1127, 1
      %v1130 = vsel %vm1119, %v1125, %v1129
      %v1131 = vshrl.u32 %v757, 16
      %1133 = vrot.lane.b32.xlu0 %v1130, 96
      %v1134 = vpop.permute.xlu0 %1133
      %1135 = vrot.lane.b32.xlu0 %v1131, 96
      %v1136 = vpop.permute.xlu0 %1135
      %v1138 = vsel %vm764, %v1130, 0
      %v1141 = vsel %vm764, %v1131, 0
      %v1144 = vsel %vm764, %v1134, 0
      %v1147 = vsel %vm764, %v1136, 0
      %1149 = vmatprep.subr.bf16.mxu0 0
      %1150 = vmatpush1.bf16.xpose.msra.mxu0 %v1144
      %1151 = vmatprep.subr.bf16.mxu0 0
      %1152 = vmatpush1.bf16.xpose.msra.mxu0 %v1147
      %1153 = vmatprep.subr.bf16.mxu0 0
      %1154 = vmatpush1.bf16.xpose.msra.mxu0 0
      %1155 = vmatprep.subr.bf16.mxu0 0
      %1156 = vmatpush1.bf16.xpose.msra.mxu0 0
      %1157 = vmatprep.subr.bf16.mxu0 0
      %1158 = vmatpush1.bf16.xpose.msra.mxu0 0
      %1159 = vmatprep.subr.bf16.mxu0 0
      %1160 = vmatpush1.bf16.xpose.msra.mxu0 0
      %1161 = vmatprep.subr.bf16.mxu0 0
      %1162 = vmatpush1.bf16.xpose.msra.mxu0 0
      %1163 = vmatprep.subr.bf16.mxu0 0
      %1164 = vmatpush1.bf16.xpose.msra.mxu0 0
      %1165 = vmatprep.subr.bf16.mxu0 0
      %1166 = vmatpush1.bf16.xpose.msra.mxu0 0
      %1167 = vmatprep.subr.bf16.mxu0 0
      %1168 = vmatpush1.bf16.xpose.msra.mxu0 0
      %1169 = vmatprep.subr.bf16.mxu0 0
      %1170 = vmatpush1.bf16.xpose.msra.mxu0 0
      %1171 = vmatprep.subr.bf16.mxu0 0
      %1172 = vmatpush1.bf16.xpose.msra.mxu0 0
      %1173 = vmatprep.subr.bf16.mxu0 0
      %1174 = vmatpush1.bf16.xpose.msra.mxu0 0
      %1175 = vmatprep.subr.bf16.mxu0 0
      %1176 = vmatpush1.bf16.xpose.msra.mxu0 0
      %1177 = vmatprep.subr.bf16.mxu0 0
      %1178 = vmatpush1.bf16.xpose.msra.mxu0 0
      %1179 = vmatprep.subr.bf16.mxu0 0
      %1180 = vmatpush1.bf16.xpose.msra.mxu0 0
      %1181 = vmatprep.mubr.bf16.mxu0 0
      %1182 = vmatmul.mubr.bf16.gmra.mrb[0].mxu0 %v1138
      %v1183 = vpop.f32.mrb[0].mxu0
      %v1184 = vadd.f32 0.0, %v1183
      %v1185 = vpop.f32.mrb[0].mxu0
      %v1186 = vpop.f32.mrb[0].mxu0
      %v1187 = vadd.f32 0.0, %v1186
      %v1188 = vpop.f32.mrb[0].mxu0
      %1189 = vmatprep.mubr.bf16.mxu0 0
      %1190 = vmatmul.mubr.bf16.gmra.mrb[0].mxu0 %v1141
      %v1191 = vpop.f32.mrb[0].mxu0
      %v1192 = vadd.f32 0.0, %v1191
      %v1193 = vpop.f32.mrb[0].mxu0
      %v1194 = vpop.f32.mrb[0].mxu0
      %v1195 = vpop.f32.mrb[0].mxu0
      %1196 = vdwg.mxu0
      %v1197 = vmul.f32 %v1184, 0.25
      %v1198 = vmul.f32 %v1187, 0.25
      %v1199 = vmul.f32 %v1192, 0.25
      %v1200 = vsel %vm828, %v1197, -inf
      %1201 = vmax.xlane.f32.xlu0 %v1200
      %v1202 = vpop.xlane.xlu0 %1201
      %v1203 = vsel %vm828, %v1198, -inf
      %1204 = vmax.xlane.f32.xlu0 %v1203
      %v1205 = vpop.xlane.xlu0 %1204
      %v1206 = vsel %vm835, %v1199, -inf
      %1207 = vmax.xlane.f32.xlu0 %v1206
      %v1208 = vpop.xlane.xlu0 %1207
      %v1209 = vsub.f32 %v1197, %v1202
      %v1210 = vsub.f32 %v1198, %v1205
      %v1211 = vsub.f32 %v1199, %v1208
      %v1212 = vmul.f32 %v1209, 1.442695
      %v1213 = vpow.pop %v1212
      %v1214 = vmul.f32 %v1210, 1.442695
      %v1215 = vpow.pop %v1214
      %v1216 = vmul.f32 %v1211, 1.442695
      %v1217 = vpow.pop %v1216
      %v1218 = vsel %vm828, %v1213, 0.0
      %1219 = vadd.xlane.f32.xlu0 %v1218
      %v1220 = vpop.xlane.xlu0 %1219
      %v1221 = vsel %vm828, %v1215, 0.0
      %1222 = vadd.xlane.f32.xlu0 %v1221
      %v1223 = vpop.xlane.xlu0 %1222
      %v1224 = vsel %vm835, %v1217, 0.0
      %1225 = vadd.xlane.f32.xlu0 %v1224
      %v1226 = vpop.xlane.xlu0 %1225
      %v1227 = vrcp.pop %v1220
      %v1228 = vrcp.pop %v1223
      %v1229 = vrcp.pop %v1226
      %v1230 = vmul.f32 %v1213, %v1227
      %v1231 = vmul.f32 %v1215, %v1228
      %v1232 = vmul.f32 %v1217, %v1229
      %v1233 = vpack.c.bf16 %v1231, %v1230
      %v1234 = vpack.c.bf16 %v1232, %v1232
      %1235 = vrot.lane.b32.xlu0 %v1130, 64
      %v1236 = vpop.permute.xlu0 %1235
      %1237 = vrot.lane.b32.xlu0 %v1131, 64
      %v1238 = vpop.permute.xlu0 %1237
      %v1241 = vsel %vm828, %v1233, 0
      %v1244 = vsel %vm828, %v1234, 0
      %v1247 = vand.u32 %v1238, %v878
      %1249 = vmatprep.subr.bf16.mxu0 0
      %1250 = vmatpush1.bf16.msra.mxu0 %v1236
      %1251 = vmatprep.subr.bf16.mxu0 0
      %1252 = vmatpush1.bf16.msra.mxu0 %v1247
      %1253 = vmatprep.subr.bf16.mxu0 0
      %1254 = vmatpush1.bf16.msra.mxu0 0
      %1255 = vmatprep.subr.bf16.mxu0 0
      %1256 = vmatpush1.bf16.msra.mxu0 0
      %1257 = vmatprep.subr.bf16.mxu0 0
      %1258 = vmatpush1.bf16.msra.mxu0 0
      %1259 = vmatprep.subr.bf16.mxu0 0
      %1260 = vmatpush1.bf16.msra.mxu0 0
      %1261 = vmatprep.subr.bf16.mxu0 0
      %1262 = vmatpush1.bf16.msra.mxu0 0
      %1263 = vmatprep.subr.bf16.mxu0 0
      %1264 = vmatpush1.bf16.msra.mxu0 0
      %1265 = vmatprep.subr.bf16.mxu0 0
      %1266 = vmatpush1.bf16.msra.mxu0 0
      %1267 = vmatprep.subr.bf16.mxu0 0
      %1268 = vmatpush1.bf16.msra.mxu0 0
      %1269 = vmatprep.subr.bf16.mxu0 0
      %1270 = vmatpush1.bf16.msra.mxu0 0
      %1271 = vmatprep.subr.bf16.mxu0 0
      %1272 = vmatpush1.bf16.msra.mxu0 0
      %1273 = vmatprep.subr.bf16.mxu0 0
      %1274 = vmatpush1.bf16.msra.mxu0 0
      %1275 = vmatprep.subr.bf16.mxu0 0
      %1276 = vmatpush1.bf16.msra.mxu0 0
      %1277 = vmatprep.subr.bf16.mxu0 0
      %1278 = vmatpush1.bf16.msra.mxu0 0
      %1279 = vmatprep.subr.bf16.mxu0 0
      %1280 = vmatpush1.bf16.msra.mxu0 0
      %1281 = vmatprep.mubr.bf16.mxu0 0
      %1282 = vmatmul.mubr.bf16.gmra.mrb[0].mxu0 %v1241
      %v1283 = vpop.f32.mrb[0].mxu0
      %v1284 = vadd.f32 0.0, %v1283
      %v1285 = vpop.f32.mrb[0].mxu0
      %v1286 = vpop.f32.mrb[0].mxu0
      %v1287 = vadd.f32 0.0, %v1286
      %v1288 = vpop.f32.mrb[0].mxu0
      %1289 = vmatprep.mubr.bf16.mxu0 0
      %1290 = vmatmul.mubr.bf16.gmra.mrb[0].mxu0 %v1244
      %v1291 = vpop.f32.mrb[0].mxu0
      %v1292 = vadd.f32 0.0, %v1291
      %v1293 = vpop.f32.mrb[0].mxu0
      %v1294 = vpop.f32.mrb[0].mxu0
      %v1295 = vpop.f32.mrb[0].mxu0
      %1296 = vdwg.mxu0
      %1297 = vst.msk [vmem:[#allocation2 + $0x11] sm:$0xff] %vm764, %v1284
      %1298 = vst.msk [vmem:[#allocation2 + $0x19] sm:$0xff] %vm764, %v1287
      %1299 = vst.msk [vmem:[#allocation2 + $0x21] sm:$0x1] %vm932, %v1292
      %1300 = vrot.lane.b32.xlu0 %v1130, 112
      %v1301 = vpop.permute.xlu0 %1300
      %1302 = vrot.lane.b32.xlu0 %v1131, 112
      %v1303 = vpop.permute.xlu0 %1302
      %1304 = vrot.lane.b32.xlu0 %v1130, 80
      %v1305 = vpop.permute.xlu0 %1304
      %1306 = vrot.lane.b32.xlu0 %v1131, 80
      %v1307 = vpop.permute.xlu0 %1306
      %v1309 = vsel %vm764, %v1301, 0
      %v1312 = vsel %vm764, %v1303, 0
      %v1315 = vsel %vm764, %v1305, 0
      %v1318 = vsel %vm764, %v1307, 0
      %1320 = vmatprep.subr.bf16.mxu0 0
      %1321 = vmatpush1.bf16.xpose.msra.mxu0 %v1315
      %1322 = vmatprep.subr.bf16.mxu0 0
      %1323 = vmatpush1.bf16.xpose.msra.mxu0 %v1318
      %1324 = vmatprep.subr.bf16.mxu0 0
      %1325 = vmatpush1.bf16.xpose.msra.mxu0 0
      %1326 = vmatprep.subr.bf16.mxu0 0
      %1327 = vmatpush1.bf16.xpose.msra.mxu0 0
      %1328 = vmatprep.subr.bf16.mxu0 0
      %1329 = vmatpush1.bf16.xpose.msra.mxu0 0
      %1330 = vmatprep.subr.bf16.mxu0 0
      %1331 = vmatpush1.bf16.xpose.msra.mxu0 0
      %1332 = vmatprep.subr.bf16.mxu0 0
      %1333 = vmatpush1.bf16.xpose.msra.mxu0 0
      %1334 = vmatprep.subr.bf16.mxu0 0
      %1335 = vmatpush1.bf16.xpose.msra.mxu0 0
      %1336 = vmatprep.subr.bf16.mxu0 0
      %1337 = vmatpush1.bf16.xpose.msra.mxu0 0
      %1338 = vmatprep.subr.bf16.mxu0 0
      %1339 = vmatpush1.bf16.xpose.msra.mxu0 0
      %1340 = vmatprep.subr.bf16.mxu0 0
      %1341 = vmatpush1.bf16.xpose.msra.mxu0 0
      %1342 = vmatprep.subr.bf16.mxu0 0
      %1343 = vmatpush1.bf16.xpose.msra.mxu0 0
      %1344 = vmatprep.subr.bf16.mxu0 0
      %1345 = vmatpush1.bf16.xpose.msra.mxu0 0
      %1346 = vmatprep.subr.bf16.mxu0 0
      %1347 = vmatpush1.bf16.xpose.msra.mxu0 0
      %1348 = vmatprep.subr.bf16.mxu0 0
      %1349 = vmatpush1.bf16.xpose.msra.mxu0 0
      %1350 = vmatprep.subr.bf16.mxu0 0
      %1351 = vmatpush1.bf16.xpose.msra.mxu0 0
      %1352 = vmatprep.mubr.bf16.mxu0 0
      %1353 = vmatmul.mubr.bf16.gmra.mrb[0].mxu0 %v1309
      %v1354 = vpop.f32.mrb[0].mxu0
      %v1355 = vadd.f32 0.0, %v1354
      %v1356 = vpop.f32.mrb[0].mxu0
      %v1357 = vpop.f32.mrb[0].mxu0
      %v1358 = vadd.f32 0.0, %v1357
      %v1359 = vpop.f32.mrb[0].mxu0
      %1360 = vmatprep.mubr.bf16.mxu0 0
      %1361 = vmatmul.mubr.bf16.gmra.mrb[0].mxu0 %v1312
      %v1362 = vpop.f32.mrb[0].mxu0
      %v1363 = vadd.f32 0.0, %v1362
      %v1364 = vpop.f32.mrb[0].mxu0
      %v1365 = vpop.f32.mrb[0].mxu0
      %v1366 = vpop.f32.mrb[0].mxu0
      %1367 = vdwg.mxu0
      %v1368 = vmul.f32 %v1355, 0.25
      %v1369 = vmul.f32 %v1358, 0.25
      %v1370 = vmul.f32 %v1363, 0.25
      %v1371 = vsel %vm828, %v1368, -inf
      %1372 = vmax.xlane.f32.xlu0 %v1371
      %v1373 = vpop.xlane.xlu0 %1372
      %v1374 = vsel %vm828, %v1369, -inf
      %1375 = vmax.xlane.f32.xlu0 %v1374
      %v1376 = vpop.xlane.xlu0 %1375
      %v1377 = vsel %vm835, %v1370, -inf
      %1378 = vmax.xlane.f32.xlu0 %v1377
      %v1379 = vpop.xlane.xlu0 %1378
      %v1380 = vsub.f32 %v1368, %v1373
      %v1381 = vsub.f32 %v1369, %v1376
      %v1382 = vsub.f32 %v1370, %v1379
      %v1383 = vmul.f32 %v1380, 1.442695
      %v1384 = vpow.pop %v1383
      %v1385 = vmul.f32 %v1381, 1.442695
      %v1386 = vpow.pop %v1385
      %v1387 = vmul.f32 %v1382, 1.442695
      %v1388 = vpow.pop %v1387
      %v1389 = vsel %vm828, %v1384, 0.0
      %1390 = vadd.xlane.f32.xlu0 %v1389
      %v1391 = vpop.xlane.xlu0 %1390
      %v1392 = vsel %vm828, %v1386, 0.0
      %1393 = vadd.xlane.f32.xlu0 %v1392
      %v1394 = vpop.xlane.xlu0 %1393
      %v1395 = vsel %vm835, %v1388, 0.0
      %1396 = vadd.xlane.f32.xlu0 %v1395
      %v1397 = vpop.xlane.xlu0 %1396
      %v1398 = vrcp.pop %v1391
      %v1399 = vrcp.pop %v1394
      %v1400 = vrcp.pop %v1397
      %v1401 = vmul.f32 %v1384, %v1398
      %v1402 = vmul.f32 %v1386, %v1399
      %v1403 = vmul.f32 %v1388, %v1400
      %v1404 = vpack.c.bf16 %v1402, %v1401
      %v1405 = vpack.c.bf16 %v1403, %v1403
      %1406 = vrot.lane.b32.xlu0 %v1130, 48
      %v1407 = vpop.permute.xlu0 %1406
      %1408 = vrot.lane.b32.xlu0 %v1131, 48
      %v1409 = vpop.permute.xlu0 %1408
      %v1412 = vsel %vm828, %v1404, 0
      %v1415 = vsel %vm828, %v1405, 0
      %v1418 = vand.u32 %v1409, %v878
      %1420 = vmatprep.subr.bf16.mxu0 0
      %1421 = vmatpush1.bf16.msra.mxu0 %v1407
      %1422 = vmatprep.subr.bf16.mxu0 0
      %1423 = vmatpush1.bf16.msra.mxu0 %v1418
      %1424 = vmatprep.subr.bf16.mxu0 0
      %1425 = vmatpush1.bf16.msra.mxu0 0
      %1426 = vmatprep.subr.bf16.mxu0 0
      %1427 = vmatpush1.bf16.msra.mxu0 0
      %1428 = vmatprep.subr.bf16.mxu0 0
      %1429 = vmatpush1.bf16.msra.mxu0 0
      %1430 = vmatprep.subr.bf16.mxu0 0
      %1431 = vmatpush1.bf16.msra.mxu0 0
      %1432 = vmatprep.subr.bf16.mxu0 0
      %1433 = vmatpush1.bf16.msra.mxu0 0
      %1434 = vmatprep.subr.bf16.mxu0 0
      %1435 = vmatpush1.bf16.msra.mxu0 0
      %1436 = vmatprep.subr.bf16.mxu0 0
      %1437 = vmatpush1.bf16.msra.mxu0 0
      %1438 = vmatprep.subr.bf16.mxu0 0
      %1439 = vmatpush1.bf16.msra.mxu0 0
      %1440 = vmatprep.subr.bf16.mxu0 0
      %1441 = vmatpush1.bf16.msra.mxu0 0
      %1442 = vmatprep.subr.bf16.mxu0 0
      %1443 = vmatpush1.bf16.msra.mxu0 0
      %1444 = vmatprep.subr.bf16.mxu0 0
      %1445 = vmatpush1.bf16.msra.mxu0 0
      %1446 = vmatprep.subr.bf16.mxu0 0
      %1447 = vmatpush1.bf16.msra.mxu0 0
      %1448 = vmatprep.subr.bf16.mxu0 0
      %1449 = vmatpush1.bf16.msra.mxu0 0
      %1450 = vmatprep.subr.bf16.mxu0 0
      %1451 = vmatpush1.bf16.msra.mxu0 0
      %1452 = vmatprep.mubr.bf16.mxu0 0
      %1453 = vmatmul.mubr.bf16.gmra.mrb[0].mxu0 %v1412
      %v1454 = vpop.f32.mrb[0].mxu0
      %v1455 = vadd.f32 0.0, %v1454
      %v1456 = vpop.f32.mrb[0].mxu0
      %v1457 = vpop.f32.mrb[0].mxu0
      %v1458 = vadd.f32 0.0, %v1457
      %v1459 = vpop.f32.mrb[0].mxu0
      %1460 = vmatprep.mubr.bf16.mxu0 0
      %1461 = vmatmul.mubr.bf16.gmra.mrb[0].mxu0 %v1415
      %v1462 = vpop.f32.mrb[0].mxu0
      %v1463 = vadd.f32 0.0, %v1462
      %v1464 = vpop.f32.mrb[0].mxu0
      %v1465 = vpop.f32.mrb[0].mxu0
      %v1466 = vpop.f32.mrb[0].mxu0
      %1467 = vdwg.mxu0
      %1471 = vrot.lane.b32.xlu0 %v1455, 16
      %v1472 = vpop.permute.xlu0 %1471
      %1473 = vrot.lane.b32.xlu0 %v1458, 16
      %v1474 = vpop.permute.xlu0 %1473
      %1475 = vrot.lane.b32.xlu0 %v1463, 16
      %v1476 = vpop.permute.xlu0 %1475
      %1480 = vst.msk [vmem:[#allocation2 + $0x11] sm:$0xff] %vm1114, %v1472
      %1481 = vst.msk [vmem:[#allocation2 + $0x19] sm:$0xff] %vm1114, %v1474
      %1482 = vst.msk [vmem:[#allocation2 + $0x21] sm:$0x1] %vm1117, %v1476
      %v1483 = vld [vmem:[#allocation2] sm:$0xff]
      %v1484 = vld [vmem:[#allocation2 + $0x8] sm:$0xff]
      %v1485 = vld [vmem:[#allocation2 + $0x10] sm:$0xff]
      %v1486 = vld [vmem:[#allocation2 + $0x18] sm:$0xff]
      %v1487 = vld [vmem:[#allocation2 + $0x20] sm:$0x3]
      %v1488 = vpack.c.bf16 %v1484, %v1483
      %v1489 = vpack.c.bf16 %v1486, %v1485
      %v1490 = vpack.c.bf16 %v1487, %v1487
      %v1491 = vld [vmem:[%s531] sm:$0xf]
      %v1492 = vld [vmem:[%s531 + $0x4] sm:$0xf]
      %v1493 = vld [vmem:[%s531 + $0x8] sm:$0xf]
      %v1494 = vld [vmem:[%s531 + $0xc] sm:$0xf]
      %v1495 = vld [vmem:[%s534] sm:$0x1]
      %v1497 = vlaneseq
      %v1498 = vshrl.u32 %v1497, 7
      %v1499 = vsub.s32 0, %v1498
      %v1500 = vrot.slane %v1495, %v1499
      %v1506 = vunpack.c.l.b16 %v1491
      %v1507 = vunpack.c.l.b16 %v1492
      %v1508 = vunpack.c.l.b16 %v1493
      %v1509 = vunpack.c.l.b16 %v1494
      %v1510 = vpack.c.b16 %v1507, %v1506
      %v1511 = vpack.c.b16 %v1509, %v1508
      %v1515 = vsel %vm581, %v1488, 0
      %v1518 = vsel %vm581, %v1489, 0
      %v1521 = vsel %vm581, %v1490, 0
      %1523 = vmatprep.subr.bf16.mxu0 0
      %1524 = vmatpush1.bf16.msra.mxu0 %v1510
      %1525 = vmatprep.subr.bf16.mxu0 0
      %1526 = vmatpush1.bf16.msra.mxu0 %v1511
      %1527 = vmatprep.subr.bf16.mxu0 0
      %1528 = vmatpush1.bf16.msra.mxu0 0
      %1529 = vmatprep.subr.bf16.mxu0 0
      %1530 = vmatpush1.bf16.msra.mxu0 0
      %1531 = vmatprep.subr.bf16.mxu0 0
      %1532 = vmatpush1.bf16.msra.mxu0 0
      %1533 = vmatprep.subr.bf16.mxu0 0
      %1534 = vmatpush1.bf16.msra.mxu0 0
      %1535 = vmatprep.subr.bf16.mxu0 0
      %1536 = vmatpush1.bf16.msra.mxu0 0
      %1537 = vmatprep.subr.bf16.mxu0 0
      %1538 = vmatpush1.bf16.msra.mxu0 0
      %1539 = vmatprep.subr.bf16.mxu0 0
      %1540 = vmatpush1.bf16.msra.mxu0 0
      %1541 = vmatprep.subr.bf16.mxu0 0
      %1542 = vmatpush1.bf16.msra.mxu0 0
      %1543 = vmatprep.subr.bf16.mxu0 0
      %1544 = vmatpush1.bf16.msra.mxu0 0
      %1545 = vmatprep.subr.bf16.mxu0 0
      %1546 = vmatpush1.bf16.msra.mxu0 0
      %1547 = vmatprep.subr.bf16.mxu0 0
      %1548 = vmatpush1.bf16.msra.mxu0 0
      %1549 = vmatprep.subr.bf16.mxu0 0
      %1550 = vmatpush1.bf16.msra.mxu0 0
      %1551 = vmatprep.subr.bf16.mxu0 0
      %1552 = vmatpush1.bf16.msra.mxu0 0
      %1553 = vmatprep.subr.bf16.mxu0 0
      %1554 = vmatpush1.bf16.msra.mxu0 0
      %1555 = vmatprep.mubr.bf16.mxu0 0
      %1556 = vmatmul.mubr.bf16.gmra.mrb[0].mxu0 %v1515
      %v1557 = vpop.f32.mrb[0].mxu0
      %v1558 = vadd.f32 %v1500, %v1557
      %v1559 = vpop.f32.mrb[0].mxu0
      %v1560 = vpop.f32.mrb[0].mxu0
      %v1561 = vadd.f32 %v1500, %v1560
      %v1562 = vpop.f32.mrb[0].mxu0
      %1563 = vmatprep.mubr.bf16.mxu0 0
      %1564 = vmatmul.mubr.bf16.gmra.mrb[0].mxu0 %v1518
      %v1565 = vpop.f32.mrb[0].mxu0
      %v1566 = vadd.f32 %v1500, %v1565
      %v1567 = vpop.f32.mrb[0].mxu0
      %v1568 = vpop.f32.mrb[0].mxu0
      %v1569 = vadd.f32 %v1500, %v1568
      %v1570 = vpop.f32.mrb[0].mxu0
      %1571 = vmatprep.mubr.bf16.mxu0 0
      %1572 = vmatmul.mubr.bf16.gmra.mrb[0].mxu0 %v1521
      %v1573 = vpop.f32.mrb[0].mxu0
      %v1574 = vadd.f32 %v1500, %v1573
      %v1575 = vpop.f32.mrb[0].mxu0
      %v1576 = vpop.f32.mrb[0].mxu0
      %v1577 = vpop.f32.mrb[0].mxu0
      %1578 = vdwg.mxu0
      %v1579 = vadd.f32 %v574, %v1558
      %v1580 = vadd.f32 %v575, %v1561
      %v1581 = vadd.f32 %v576, %v1566
      %v1582 = vadd.f32 %v577, %v1569
      %v1583 = vadd.f32 %v578, %v1574
      %v1584 = vld [vmem:[%s537] sm:$0x1]
      %v1585 = vld [vmem:[%s540] sm:$0x1]
      %v1586 = vsel %vm581, %v1579, 0.0
      %1587 = vadd.xlane.f32.xlu0 %v1586
      %v1588 = vpop.xlane.xlu0 %1587
      %v1589 = vsel %vm581, %v1580, 0.0
      %1590 = vadd.xlane.f32.xlu0 %v1589
      %v1591 = vpop.xlane.xlu0 %1590
      %v1592 = vsel %vm581, %v1581, 0.0
      %1593 = vadd.xlane.f32.xlu0 %v1592
      %v1594 = vpop.xlane.xlu0 %1593
      %v1595 = vsel %vm581, %v1582, 0.0
      %1596 = vadd.xlane.f32.xlu0 %v1595
      %v1597 = vpop.xlane.xlu0 %1596
      %v1598 = vsel %vm594, %v1583, 0.0
      %1599 = vadd.xlane.f32.xlu0 %v1598
      %v1600 = vpop.xlane.xlu0 %1599
      %v1601 = vmul.f32 %v1588, %v598
      %v1602 = vmul.f32 %v1591, %v598
      %v1603 = vmul.f32 %v1594, %v598
      %v1604 = vmul.f32 %v1597, %v598
      %v1605 = vmul.f32 %v1600, %v598
      %v1606 = vsub.f32 %v1579, %v1601
      %v1607 = vsub.f32 %v1580, %v1602
      %v1608 = vsub.f32 %v1581, %v1603
      %v1609 = vsub.f32 %v1582, %v1604
      %v1610 = vsub.f32 %v1583, %v1605
      %v1611 = vmul.f32 %v1606, %v1606
      %v1612 = vmul.f32 %v1607, %v1607
      %v1613 = vmul.f32 %v1608, %v1608
      %v1614 = vmul.f32 %v1609, %v1609
      %v1615 = vmul.f32 %v1610, %v1610
      %v1616 = vsel %vm581, %v1611, 0.0
      %1617 = vadd.xlane.f32.xlu0 %v1616
      %v1618 = vpop.xlane.xlu0 %1617
      %v1619 = vsel %vm581, %v1612, 0.0
      %1620 = vadd.xlane.f32.xlu0 %v1619
      %v1621 = vpop.xlane.xlu0 %1620
      %v1622 = vsel %vm581, %v1613, 0.0
      %1623 = vadd.xlane.f32.xlu0 %v1622
      %v1624 = vpop.xlane.xlu0 %1623
      %v1625 = vsel %vm581, %v1614, 0.0
      %1626 = vadd.xlane.f32.xlu0 %v1625
      %v1627 = vpop.xlane.xlu0 %1626
      %v1628 = vsel %vm594, %v1615, 0.0
      %1629 = vadd.xlane.f32.xlu0 %v1628
      %v1630 = vpop.xlane.xlu0 %1629
      %v1631 = vmul.f32 %v1618, %v598
      %v1632 = vmul.f32 %v1621, %v598
      %v1633 = vmul.f32 %v1624, %v598
      %v1634 = vmul.f32 %v1627, %v598
      %v1635 = vmul.f32 %v1630, %v598
      %v1636 = vadd.f32 %v1631, 1e-05
      %v1637 = vadd.f32 %v1632, 1e-05
      %v1638 = vadd.f32 %v1633, 1e-05
      %v1639 = vadd.f32 %v1634, 1e-05
      %v1640 = vadd.f32 %v1635, 1e-05
      %v1641 = vrsqrt.pop %v1636
      %v1642 = vrsqrt.pop %v1637
      %v1643 = vrsqrt.pop %v1638
      %v1644 = vrsqrt.pop %v1639
      %v1645 = vrsqrt.pop %v1640
      %v1646 = vmul.f32 %v1606, %v1641
      %v1647 = vmul.f32 %v1607, %v1642
      %v1648 = vmul.f32 %v1608, %v1643
      %v1649 = vmul.f32 %v1609, %v1644
      %v1650 = vmul.f32 %v1610, %v1645
      %v1652 = vlaneseq
      %v1653 = vshrl.u32 %v1652, 7
      %v1654 = vsub.s32 0, %v1653
      %v1655 = vrot.slane %v1584, %v1654
      %v1657 = vmul.f32 %v1646, %v1655
      %v1658 = vmul.f32 %v1647, %v1655
      %v1659 = vmul.f32 %v1648, %v1655
      %v1660 = vmul.f32 %v1649, %v1655
      %v1661 = vmul.f32 %v1650, %v1655
      %v1663 = vlaneseq
      %v1664 = vshrl.u32 %v1663, 7
      %v1665 = vsub.s32 0, %v1664
      %v1666 = vrot.slane %v1585, %v1665
      %v1668 = vadd.f32 %v1657, %v1666
      %v1669 = vadd.f32 %v1658, %v1666
      %v1670 = vadd.f32 %v1659, %v1666
      %v1671 = vadd.f32 %v1660, %v1666
      %v1672 = vadd.f32 %v1661, %v1666
      %v1673 = vpack.c.bf16 %v1669, %v1668
      %v1674 = vpack.c.bf16 %v1671, %v1670
      %v1675 = vpack.c.bf16 %v1672, %v1672
      %v1676 = vld [vmem:[%s545] sm:$0xf]
      %v1677 = vld [vmem:[%s545 + $0x4] sm:$0xf]
      %v1678 = vld [vmem:[%s545 + $0x8] sm:$0xf]
      %v1679 = vld [vmem:[%s545 + $0xc] sm:$0xf]
      %v1680 = vld [vmem:[%s548] sm:$0x1]
      %v1682 = vlaneseq
      %v1683 = vshrl.u32 %v1682, 7
      %v1684 = vsub.s32 0, %v1683
      %v1685 = vrot.slane %v1680, %v1684
      %v1691 = vunpack.c.l.b16 %v1676
      %v1692 = vunpack.c.l.b16 %v1677
      %v1693 = vunpack.c.l.b16 %v1678
      %v1694 = vunpack.c.l.b16 %v1679
      %v1695 = vpack.c.b16 %v1692, %v1691
      %v1696 = vpack.c.b16 %v1694, %v1693
      %v1700 = vsel %vm581, %v1673, 0
      %v1703 = vsel %vm581, %v1674, 0
      %v1706 = vsel %vm581, %v1675, 0
      %1708 = vmatprep.subr.bf16.mxu0 0
      %1709 = vmatpush1.bf16.msra.mxu0 %v1695
      %1710 = vmatprep.subr.bf16.mxu0 0
      %1711 = vmatpush1.bf16.msra.mxu0 %v1696
      %1712 = vmatprep.subr.bf16.mxu0 0
      %1713 = vmatpush1.bf16.msra.mxu0 0
      %1714 = vmatprep.subr.bf16.mxu0 0
      %1715 = vmatpush1.bf16.msra.mxu0 0
      %1716 = vmatprep.subr.bf16.mxu0 0
      %1717 = vmatpush1.bf16.msra.mxu0 0
      %1718 = vmatprep.subr.bf16.mxu0 0
      %1719 = vmatpush1.bf16.msra.mxu0 0
      %1720 = vmatprep.subr.bf16.mxu0 0
      %1721 = vmatpush1.bf16.msra.mxu0 0
      %1722 = vmatprep.subr.bf16.mxu0 0
      %1723 = vmatpush1.bf16.msra.mxu0 0
      %1724 = vmatprep.subr.bf16.mxu0 0
      %1725 = vmatpush1.bf16.msra.mxu0 0
      %1726 = vmatprep.subr.bf16.mxu0 0
      %1727 = vmatpush1.bf16.msra.mxu0 0
      %1728 = vmatprep.subr.bf16.mxu0 0
      %1729 = vmatpush1.bf16.msra.mxu0 0
      %1730 = vmatprep.subr.bf16.mxu0 0
      %1731 = vmatpush1.bf16.msra.mxu0 0
      %1732 = vmatprep.subr.bf16.mxu0 0
      %1733 = vmatpush1.bf16.msra.mxu0 0
      %1734 = vmatprep.subr.bf16.mxu0 0
      %1735 = vmatpush1.bf16.msra.mxu0 0
      %1736 = vmatprep.subr.bf16.mxu0 0
      %1737 = vmatpush1.bf16.msra.mxu0 0
      %1738 = vmatprep.subr.bf16.mxu0 0
      %1739 = vmatpush1.bf16.msra.mxu0 0
      %1740 = vmatprep.mubr.bf16.mxu0 0
      %1741 = vmatmul.mubr.bf16.gmra.mrb[0].mxu0 %v1700
      %v1742 = vpop.f32.mrb[0].mxu0
      %v1743 = vadd.f32 %v1685, %v1742
      %v1744 = vpop.f32.mrb[0].mxu0
      %v1745 = vpop.f32.mrb[0].mxu0
      %v1746 = vadd.f32 %v1685, %v1745
      %v1747 = vpop.f32.mrb[0].mxu0
      %1748 = vmatprep.mubr.bf16.mxu0 0
      %1749 = vmatmul.mubr.bf16.gmra.mrb[0].mxu0 %v1703
      %v1750 = vpop.f32.mrb[0].mxu0
      %v1751 = vadd.f32 %v1685, %v1750
      %v1752 = vpop.f32.mrb[0].mxu0
      %v1753 = vpop.f32.mrb[0].mxu0
      %v1754 = vadd.f32 %v1685, %v1753
      %v1755 = vpop.f32.mrb[0].mxu0
      %1756 = vmatprep.mubr.bf16.mxu0 0
      %1757 = vmatmul.mubr.bf16.gmra.mrb[0].mxu0 %v1706
      %v1758 = vpop.f32.mrb[0].mxu0
      %v1759 = vadd.f32 %v1685, %v1758
      %v1760 = vpop.f32.mrb[0].mxu0
      %v1761 = vpop.f32.mrb[0].mxu0
      %v1762 = vpop.f32.mrb[0].mxu0
      %1763 = vdwg.mxu0
      %v1764 = vmul.f32 %v1743, %v1743
      %v1765 = vmul.f32 %v1746, %v1746
      %v1766 = vmul.f32 %v1751, %v1751
      %v1767 = vmul.f32 %v1754, %v1754
      %v1768 = vmul.f32 %v1759, %v1759
      %v1769 = vmul.f32 %v1743, %v1764
      %v1770 = vmul.f32 %v1746, %v1765
      %v1771 = vmul.f32 %v1751, %v1766
      %v1772 = vmul.f32 %v1754, %v1767
      %v1773 = vmul.f32 %v1759, %v1768
      %v1774 = vmul.f32 %v1769, 0.044715
      %v1775 = vmul.f32 %v1770, 0.044715
      %v1776 = vmul.f32 %v1771, 0.044715
      %v1777 = vmul.f32 %v1772, 0.044715
      %v1778 = vmul.f32 %v1773, 0.044715
      %v1779 = vadd.f32 %v1743, %v1774
      %v1780 = vadd.f32 %v1746, %v1775
      %v1781 = vadd.f32 %v1751, %v1776
      %v1782 = vadd.f32 %v1754, %v1777
      %v1783 = vadd.f32 %v1759, %v1778
      %v1784 = vmul.f32 %v1779, 0.7978846
      %v1785 = vmul.f32 %v1780, 0.7978846
      %v1786 = vmul.f32 %v1781, 0.7978846
      %v1787 = vmul.f32 %v1782, 0.7978846
      %v1788 = vmul.f32 %v1783, 0.7978846
      %v1789 = vtanh.pop %v1784
      %v1790 = vtanh.pop %v1785
      %v1791 = vtanh.pop %v1786
      %v1792 = vtanh.pop %v1787
      %v1793 = vtanh.pop %v1788
      %v1794 = vadd.f32 %v1789, 1.0
      %v1795 = vadd.f32 %v1790, 1.0
      %v1796 = vadd.f32 %v1791, 1.0
      %v1797 = vadd.f32 %v1792, 1.0
      %v1798 = vadd.f32 %v1793, 1.0
      %v1799 = vmul.f32 %v1794, 0.5
      %v1800 = vmul.f32 %v1795, 0.5
      %v1801 = vmul.f32 %v1796, 0.5
      %v1802 = vmul.f32 %v1797, 0.5
      %v1803 = vmul.f32 %v1798, 0.5
      %v1804 = vmul.f32 %v1743, %v1799
      %v1805 = vmul.f32 %v1746, %v1800
      %v1806 = vmul.f32 %v1751, %v1801
      %v1807 = vmul.f32 %v1754, %v1802
      %v1808 = vmul.f32 %v1759, %v1803
      %v1809 = vpack.c.bf16 %v1805, %v1804
      %v1810 = vpack.c.bf16 %v1807, %v1806
      %v1811 = vpack.c.bf16 %v1808, %v1808
      %v1812 = vld [vmem:[%s553] sm:$0xf]
      %v1813 = vld [vmem:[%s553 + $0x4] sm:$0xf]
      %v1814 = vld [vmem:[%s553 + $0x8] sm:$0xf]
      %v1815 = vld [vmem:[%s553 + $0xc] sm:$0xf]
      %v1816 = vld [vmem:[%s553 + $0x10] sm:$0xf]
      %v1817 = vld [vmem:[%s553 + $0x14] sm:$0xf]
      %v1818 = vld [vmem:[%s553 + $0x18] sm:$0xf]
      %v1819 = vld [vmem:[%s553 + $0x1c] sm:$0xf]
      %v1820 = vld [vmem:[%s556] sm:$0x1]
      %v1822 = vlaneseq
      %v1823 = vshrl.u32 %v1822, 7
      %v1824 = vsub.s32 0, %v1823
      %v1825 = vrot.slane %v1820, %v1824
      %v1835 = vunpack.c.l.b16 %v1812
      %v1836 = vunpack.c.l.b16 %v1813
      %v1837 = vunpack.c.l.b16 %v1814
      %v1838 = vunpack.c.l.b16 %v1815
      %v1839 = vunpack.c.l.b16 %v1816
      %v1840 = vunpack.c.l.b16 %v1817
      %v1841 = vunpack.c.l.b16 %v1818
      %v1842 = vunpack.c.l.b16 %v1819
      %v1843 = vpack.c.b16 %v1836, %v1835
      %v1844 = vpack.c.b16 %v1838, %v1837
      %v1845 = vpack.c.b16 %v1840, %v1839
      %v1846 = vpack.c.b16 %v1842, %v1841
      %vm1851 = vcmask 523264
      %v1853 = vsel %vm1851, %v1809, 0
      %v1856 = vsel %vm1851, %v1810, 0
      %v1859 = vsel %vm1851, %v1811, 0
      %1861 = vmatprep.subr.bf16.mxu0 0
      %1862 = vmatpush1.bf16.msra.mxu0 %v1843
      %1863 = vmatprep.subr.bf16.mxu0 0
      %1864 = vmatpush1.bf16.msra.mxu0 %v1844
      %1865 = vmatprep.subr.bf16.mxu0 0
      %1866 = vmatpush1.bf16.msra.mxu0 %v1845
      %1867 = vmatprep.subr.bf16.mxu0 0
      %1868 = vmatpush1.bf16.msra.mxu0 %v1846
      %1869 = vmatprep.subr.bf16.mxu0 0
      %1870 = vmatpush1.bf16.msra.mxu0 0
      %1871 = vmatprep.subr.bf16.mxu0 0
      %1872 = vmatpush1.bf16.msra.mxu0 0
      %1873 = vmatprep.subr.bf16.mxu0 0
      %1874 = vmatpush1.bf16.msra.mxu0 0
      %1875 = vmatprep.subr.bf16.mxu0 0
      %1876 = vmatpush1.bf16.msra.mxu0 0
      %1877 = vmatprep.subr.bf16.mxu0 0
      %1878 = vmatpush1.bf16.msra.mxu0 0
      %1879 = vmatprep.subr.bf16.mxu0 0
      %1880 = vmatpush1.bf16.msra.mxu0 0
      %1881 = vmatprep.subr.bf16.mxu0 0
      %1882 = vmatpush1.bf16.msra.mxu0 0
      %1883 = vmatprep.subr.bf16.mxu0 0
      %1884 = vmatpush1.bf16.msra.mxu0 0
      %1885 = vmatprep.subr.bf16.mxu0 0
      %1886 = vmatpush1.bf16.msra.mxu0 0
      %1887 = vmatprep.subr.bf16.mxu0 0
      %1888 = vmatpush1.bf16.msra.mxu0 0
      %1889 = vmatprep.subr.bf16.mxu0 0
      %1890 = vmatpush1.bf16.msra.mxu0 0
      %1891 = vmatprep.subr.bf16.mxu0 0
      %1892 = vmatpush1.bf16.msra.mxu0 0
      %1893 = vmatprep.mubr.bf16.mxu0 0
      %1894 = vmatmul.mubr.bf16.gmra.mrb[0].mxu0 %v1853
      %v1895 = vpop.f32.mrb[0].mxu0
      %v1896 = vadd.f32 %v1825, %v1895
      %v1897 = vpop.f32.mrb[0].mxu0
      %v1898 = vpop.f32.mrb[0].mxu0
      %v1899 = vadd.f32 %v1825, %v1898
      %v1900 = vpop.f32.mrb[0].mxu0
      %1901 = vmatprep.mubr.bf16.mxu0 0
      %1902 = vmatmul.mubr.bf16.gmra.mrb[0].mxu0 %v1856
      %v1903 = vpop.f32.mrb[0].mxu0
      %v1904 = vadd.f32 %v1825, %v1903
      %v1905 = vpop.f32.mrb[0].mxu0
      %v1906 = vpop.f32.mrb[0].mxu0
      %v1907 = vadd.f32 %v1825, %v1906
      %v1908 = vpop.f32.mrb[0].mxu0
      %1909 = vmatprep.mubr.bf16.mxu0 0
      %1910 = vmatmul.mubr.bf16.gmra.mrb[0].mxu0 %v1859
      %v1911 = vpop.f32.mrb[0].mxu0
      %v1912 = vadd.f32 %v1825, %v1911
      %v1913 = vpop.f32.mrb[0].mxu0
      %v1914 = vpop.f32.mrb[0].mxu0
      %v1915 = vpop.f32.mrb[0].mxu0
      %1916 = vdwg.mxu0
      %v1917 = vadd.f32 %v1579, %v1896
      %v1918 = vadd.f32 %v1580, %v1899
      %v1919 = vadd.f32 %v1581, %v1904
      %v1920 = vadd.f32 %v1582, %v1907
      %v1921 = vadd.f32 %v1583, %v1912
      %1922 = vst.msk [vmem:[%s12] sm:$0xff] %vm581, %v1917
      %1923 = vst.msk [vmem:[%s12 + $0x8] sm:$0xff] %vm581, %v1918
      %1924 = vst.msk [vmem:[%s12 + $0x10] sm:$0xff] %vm581, %v1919
      %1925 = vst.msk [vmem:[%s12 + $0x18] sm:$0xff] %vm581, %v1920
      %1926 = vst.msk [vmem:[%s12 + $0x20] sm:$0x3] %vm594, %v1921
      // Predicated region
      $region73: #{transformer_forward.1} parent=67 // pred_check
        %p1927 = pneg %p343
      $region74: #{transformer_forward.1} parent=67 // pred_check_branch
        %1929 = sbr.rel (%p1927) target = $region76
      $region75: #{transformer_forward.1} parent=67 // pred_region
        _
      $region76: #{transformer_forward.1} parent=67 // pred_fallthru
        _
      // Predicated region
      $region77: #{transformer_forward.1} parent=67 // pred_check
        %p1930 = pneg %p343
      $region78: #{transformer_forward.1} parent=67 // pred_check_branch
        %1932 = sbr.rel (%p1930) target = $region80
      $region79: #{transformer_forward.1} parent=67 // pred_region
        _
      $region80: #{transformer_forward.1} parent=67 // pred_fallthru
        _
    $region68: #{transformer_forward.1} parent=5 // pred_fallthru
      _
    %p1933 = scmp.le.s32.totalorder 2, %s18
    // Predicated region
    $region81: #{transformer_forward.1} parent=5 // pred_check
      %p1934 = pneg %p1933
    $region82: #{transformer_forward.1} parent=5 // pred_check_branch
      %1936 = sbr.rel (%p1934) target = $region84
    $region83: #{transformer_forward.1} parent=5 // pred_region
      %s1937 = ssub.s32 %s18, 2
    $region84: #{transformer_forward.1} parent=5 // pred_fallthru
      _
  $region6: #{transformer_forward.1} parent=0 // loop_footer
    %s22 = sadd.s32 1, %s18
  $region7: #{transformer_forward.1} parent=0 // loop_footer_branch
    %17 = sbr.rel target = $region3
  $region8: #{transformer_forward.1} parent=0 // loop_exit
    _

</llo_original>
